<compile_context>
chip_gen: v7x
topology: tpu7x:2x2x1
jax: 0.10.0
libtpu: 0.0.40
codegen_flags: <defaults>
</compile_context>

<pallas_src>
import math

import numpy as np
import jax
import jax.numpy as jnp
from jax import lax
from jax.experimental import pallas as pl
from jax.experimental.pallas import tpu as pltpu

BRANCH_KS = (2, 3, 6)   # non-trivial MaxPool kernel/stride sizes (k=1 is identity)


def _round_up(x: int, m: int) -> int:
    return (x + m - 1) // m * m


def _interp_matrix(out_size: int, in_size: int) -> np.ndarray:
    """A (out_size, in_size): 1-D bilinear interpolation, align_corners=True."""
    A = np.zeros((out_size, in_size), dtype=np.float64)
    if in_size == 1 or out_size == 1:
        A[:, 0] = 1.0
        return A.astype(np.float32)
    scale = (in_size - 1) / (out_size - 1)
    for i in range(out_size):
        src = i * scale
        i0 = min(int(math.floor(src)), in_size - 1)
        i1 = min(i0 + 1, in_size - 1)
        frac = src - i0
        A[i, i0] += 1.0 - frac
        A[i, i1] += frac
    return A.astype(np.float32)


def _branch_matrices(H: int, W: int, k: int):
    """Compact (selection, upsample) matrix pair for one pooling branch.

    S: (H*W, Pp)  0/1, picks the stride-k pooled cells out of the stride-1
                  sliding-max conv output (flat spatial index h*W + w).
    U: (Pp, H*W)  kron(Ah, Aw)^T, bilinear align_corners=True upsample of the
                  (Ph, Pw) pooled grid back to (H, W).
    Pp = Ph*Pw rounded up to a multiple of 8 (zero padded; numerically exact).
    """
    Ph, Pw = H // k, W // k
    P = Ph * Pw
    Pp = _round_up(P, 8)
    Ah = _interp_matrix(H, Ph)                    # (H, Ph)
    Aw = _interp_matrix(W, Pw)                    # (W, Pw)
    U = np.zeros((Pp, H * W), dtype=np.float32)
    U[:P, :] = np.kron(Ah, Aw).T                  # [i*Pw+j, h*W+w] = Ah[h,i]*Aw[w,j]
    S = np.zeros((H * W, Pp), dtype=np.float32)
    rows = (np.arange(Ph)[:, None] * (k * W) + np.arange(Pw)[None, :] * k).ravel()
    S[rows, np.arange(P)] = 1.0
    return S, U


def _make_spp_kernel(C: int, W: int, HW: int, ks=BRANCH_KS):
    nb = len(ks)
    total = C * HW

    def kernel(x_ref, w_ref, b_ref, s2_ref, u2_ref, s3_ref, u3_ref,
               s6_ref, u6_ref, o_ref):
        branch_mats = ((s2_ref, u2_ref), (s3_ref, u3_ref), (s6_ref, u6_ref))
        tn = x_ref.shape[0]
        x = x_ref[...]                            # (tn, C*HW) f32, lane-dense

        def shift_fwd(t, d):
            # out[., p] = t[., (p + d) % (C*HW)]  (XLU rotate; wrapped /
            # cross-channel positions are never selected downstream).
            return pltpu.roll(t, total - d, axis=1)

        # Stride-1 sliding max along the fast (W) axis, shared across branches.
        a2 = jnp.maximum(x, shift_fwd(x, 1))      # window 2
        a3 = jnp.maximum(a2, shift_fwd(x, 2))     # window 3
        a6 = jnp.maximum(a3, shift_fwd(a3, 3))    # window 6

        def sliding_max_rows(t, k):
            # max over offsets {0, W, ..., (k-1)*W}; doubling tree.
            m = t
            covered = 1
            while covered < k:
                d = min(covered, k - covered)
                m = jnp.maximum(m, shift_fwd(m, d * W))
                covered += d
            return m

        # Hoisted once per grid step; shared by all 1 + nb conv calls.
        ws = [w_ref[c] for c in range(C)]
        bias_plane = jnp.full((tn, HW), b_ref[0], dtype=jnp.float32)

        def conv1x1(t):                           # (tn, C*HW) -> (tn, HW)
            # Independent partial accumulators: no length-C serial FMA chain.
            n_acc = min(4, C)
            accs = [None] * n_acc
            for c in range(C):
                term = ws[c] * t[:, c * HW:(c + 1) * HW]
                prev = accs[c % n_acc]
                accs[c % n_acc] = term if prev is None else prev + term
            acc = bias_plane
            for a in accs:
                if a is not None:
                    acc = acc + a
            return acc

        # Branch k=1: max pool and same-size align_corners resize are identities.
        o_ref[:, 0:HW] = conv1x1(x)

        # Branches k in ks: sliding max along rows, shared 1x1 conv, then two
        # thin MXU matmuls (pooled-cell selection + bilinear upsample).
        for b, (k, base) in enumerate(zip(ks, (a2, a3, a6))):
            s_ref, u_ref = branch_mats[b]
            conv = conv1x1(sliding_max_rows(base, k))                  # (tn, HW)
            pooled = jnp.dot(conv, s_ref[...],
                             preferred_element_type=jnp.float32)       # (tn, Pp)
            up = jnp.dot(pooled, u_ref[...],
                         preferred_element_type=jnp.float32)           # (tn, HW)
            o_ref[:, (1 + b) * HW:(2 + b) * HW] = up

    return kernel


def _tpu_generation():
    """Returns (physical VMEM bytes per core, TensorCores sharing the grid)."""
    vmem = 64 << 20                               # conservative default (v7x per-TC)
    cores = 1
    try:
        info = pltpu.get_tpu_info()
        vmem = int(getattr(info, "vmem_capacity_bytes", vmem))
    except Exception:
        pass
    try:
        kind = jax.devices()[0].device_kind.lower()
        if "v7" in kind:
            cores = 2                             # megacore: 2 TCs share one grid axis
    except Exception:
        pass
    return vmem, cores


def _choose_tn(N, C, HW, nb, const_bytes, vmem_bytes, cores):
    """Batch elements per grid step.

    Largest divisor of N whose double-buffered blocks + live temporaries fit
    the VMEM budget.  tn is the second-minor dim of the x/out blocks, so it
    must be N or a multiple of 8 (sublane tiling rule).  On megacore parts we
    additionally prefer a core-balanced (divisible by `cores`) step count; on
    single-TC chips (v5e/v6e) we just take the biggest fitting tile."""
    budget = min(int(vmem_bytes * 0.45), 48 << 20)

    def fits(tn):
        io = 2 * 4 * tn * HW * (C + 1 + nb)       # double-buffered x / out blocks
        tmp = 6 * 4 * tn * C * HW                 # x, a2, a3, a6 + in-flight maxes
        return io + tmp + 2 * const_bytes <= budget

    divisors = sorted((d for d in range(1, N + 1) if N % d == 0), reverse=True)
    legal = [d for d in divisors if d == N or d % 8 == 0]
    cands = [d for d in legal if fits(d)] or [min(legal)]
    if cores > 1 and N >= cores:
        balanced = [d for d in cands if (N // d) % cores == 0]
        if balanced:
            cands = balanced
    return cands[0]


def spp_block(x, conv_w, conv_b, *, tn=None):
    """x: (N, C, H, W) f32; conv_w: (C,) f32 (Conv2d(C,1,1) weight); conv_b: (1,)."""
    N, C, H, W = x.shape
    HW = H * W
    nb = len(BRANCH_KS)
    for k in BRANCH_KS:
        assert H >= k and W >= k, "pool window larger than the feature map"

    mats = [_branch_matrices(H, W, k) for k in BRANCH_KS]
    mat_args = [jnp.asarray(m) for pair in mats for m in pair]
    const_bytes = sum(_round_up(m.shape[0], 8) * _round_up(m.shape[1], 128) * 4
                      for pair in mats for m in pair)

    vmem_bytes, cores = _tpu_generation()
    if tn is None:
        tn = _choose_tn(N, C, HW, nb, const_bytes, vmem_bytes, cores)
    grid = (N // tn,)

    # VMEM limit: generation-aware cap with headroom, but always enough for the
    # chosen blocks + temporaries.
    need = 2 * 4 * tn * HW * (C + 1 + nb) + 6 * 4 * tn * C * HW + 2 * const_bytes
    vmem_limit = max(16 << 20, min(int(0.5 * vmem_bytes), 48 << 20))
    vmem_limit = int(min(max(vmem_limit, need + (4 << 20)), vmem_bytes - (8 << 20)))

    mat_specs = [pl.BlockSpec(m.shape, lambda n: (0, 0)) for m in mat_args]

    out = pl.pallas_call(
        _make_spp_kernel(C, W, HW),
        out_shape=jax.ShapeDtypeStruct((N, (1 + nb) * HW), jnp.float32),
        grid_spec=pltpu.PrefetchScalarGridSpec(
            num_scalar_prefetch=0,
            grid=grid,
            in_specs=[
                pl.BlockSpec((tn, C * HW), lambda n: (n, 0)),            # x, lane-dense
                pl.BlockSpec(memory_space=pltpu.MemorySpace.SMEM),       # conv weight (C,)
                pl.BlockSpec(memory_space=pltpu.MemorySpace.SMEM),       # conv bias (1,)
                *mat_specs,                                              # S_k / U_k pairs
            ],
            out_specs=pl.BlockSpec((tn, (1 + nb) * HW), lambda n: (n, 0)),
        ),
        compiler_params=pltpu.CompilerParams(
            dimension_semantics=("parallel",),
            vmem_limit_bytes=vmem_limit,
        ),
    )(x.reshape(N, C * HW), conv_w, conv_b, *mat_args)
    return out.reshape(N, 1 + nb, H, W)


def spp_ref(x, conv_w, conv_b):
    """Pure-JAX reference with identical pooling/conv/interpolation semantics."""
    N, C, H, W = x.shape
    outs = []
    for k in (1,) + BRANCH_KS:
        if k == 1:
            p = x
        else:
            p = lax.reduce_window(x, -jnp.inf, lax.max,
                                  (1, 1, k, k), (1, 1, k, k), "VALID")
        c = jnp.einsum("nchw,c->nhw", p, conv_w,
                       precision=lax.Precision.HIGHEST) + conv_b[0]
        Ah = jnp.asarray(_interp_matrix(H, p.shape[2]))
        Aw = jnp.asarray(_interp_matrix(W, p.shape[3]))
        up = jnp.einsum("hp,npq,wq->nhw", Ah, c, Aw,
                        precision=lax.Precision.HIGHEST)
        outs.append(up[:, None])
    return jnp.concatenate(outs, axis=1)


if __name__ == "__main__":
    N, C, H, W = 2, 4, 16, 16
    key = jax.random.PRNGKey(0)
    kx, kw, kb = jax.random.split(key, 3)

    x = jax.random.normal(kx, (N, C, H, W), dtype=jnp.float32)
    # Deterministic synthetic Conv2d(C, 1, kernel_size=1) parameters.
    bound = 1.0 / math.sqrt(C)
    conv_w = jax.random.uniform(kw, (C,), jnp.float32, -bound, bound)  # (1,C,1,1) flat
    conv_b = jax.random.uniform(kb, (1,), jnp.float32, -bound, bound)  # bias (1,)

    out = jax.block_until_ready(spp_block(x, conv_w, conv_b))
    ref = jax.block_until_ready(spp_ref(x, conv_w, conv_b))

    assert out.shape == (N, 4, H, W) and out.dtype == jnp.float32
    max_err = float(jnp.max(jnp.abs(out - ref)))
    assert max_err < 2e-2, f"mismatch vs reference: max abs err = {max_err}"
    print("KERNEL_OK")
</pallas_src>

<mosaic_0001>
module attributes {stable_mosaic.version = 11 : i64} {
  func.func @kernel(%arg0: i32, %arg1: memref<2x1024xf32, #tpu.memory_space<vmem>>, %arg2: memref<4xf32, #tpu.memory_space<smem>>, %arg3: memref<1xf32, #tpu.memory_space<smem>>, %arg4: memref<256x64xf32, #tpu.memory_space<vmem>>, %arg5: memref<64x256xf32, #tpu.memory_space<vmem>>, %arg6: memref<256x32xf32, #tpu.memory_space<vmem>>, %arg7: memref<32x256xf32, #tpu.memory_space<vmem>>, %arg8: memref<256x8xf32, #tpu.memory_space<vmem>>, %arg9: memref<8x256xf32, #tpu.memory_space<vmem>>, %arg10: memref<2x1024xf32, #tpu.memory_space<vmem>>) attributes {dimension_semantics = [#tpu.dimension_semantics<parallel>], iteration_bounds = array<i64: 1>, scalar_prefetch = 0 : i64, scratch_operands = 0 : i64, tpu.core_type = #tpu.core_type<tc>, window_params = [{transform_indices = @transform_0, window_bounds = array<i64: 2, 1024>}, {transform_indices = @transform_1, window_bounds = array<i64: 4>}, {transform_indices = @transform_2, window_bounds = array<i64: 1>}, {pipeline_mode = #tpu.pipeline_mode<synchronous>, transform_indices = @transform_3, window_bounds = array<i64: 256, 64>}, {pipeline_mode = #tpu.pipeline_mode<synchronous>, transform_indices = @transform_4, window_bounds = array<i64: 64, 256>}, {pipeline_mode = #tpu.pipeline_mode<synchronous>, transform_indices = @transform_5, window_bounds = array<i64: 256, 32>}, {pipeline_mode = #tpu.pipeline_mode<synchronous>, transform_indices = @transform_6, window_bounds = array<i64: 32, 256>}, {pipeline_mode = #tpu.pipeline_mode<synchronous>, transform_indices = @transform_7, window_bounds = array<i64: 256, 8>}, {pipeline_mode = #tpu.pipeline_mode<synchronous>, transform_indices = @transform_8, window_bounds = array<i64: 8, 256>}, {transform_indices = @transform_9, window_bounds = array<i64: 2, 1024>}]} {
    %c0 = arith.constant 0 : index
    %c0_0 = arith.constant 0 : index
    %0 = vector.load %arg1[%c0, %c0_0] : memref<2x1024xf32, #tpu.memory_space<vmem>>, vector<2x1024xf32>
    %c1023_i32 = arith.constant 1023 : i32
    %1 = tpu.dynamic_rotate %0 by %c1023_i32 dim 1 : vector<2x1024xf32>, i32 -> vector<2x1024xf32>
    %2 = arith.maximumf %0, %1 : vector<2x1024xf32>
    %c1022_i32 = arith.constant 1022 : i32
    %3 = tpu.dynamic_rotate %0 by %c1022_i32 dim 1 : vector<2x1024xf32>, i32 -> vector<2x1024xf32>
    %4 = arith.maximumf %2, %3 : vector<2x1024xf32>
    %c1021_i32 = arith.constant 1021 : i32
    %5 = tpu.dynamic_rotate %4 by %c1021_i32 dim 1 : vector<2x1024xf32>, i32 -> vector<2x1024xf32>
    %6 = arith.maximumf %4, %5 : vector<2x1024xf32>
    %c0_1 = arith.constant 0 : index
    %7 = memref.load %arg2[%c0_1] : memref<4xf32, #tpu.memory_space<smem>>
    %c1 = arith.constant 1 : index
    %8 = memref.load %arg2[%c1] : memref<4xf32, #tpu.memory_space<smem>>
    %c2 = arith.constant 2 : index
    %9 = memref.load %arg2[%c2] : memref<4xf32, #tpu.memory_space<smem>>
    %c3 = arith.constant 3 : index
    %10 = memref.load %arg2[%c3] : memref<4xf32, #tpu.memory_space<smem>>
    %c0_2 = arith.constant 0 : index
    %11 = memref.load %arg3[%c0_2] : memref<1xf32, #tpu.memory_space<smem>>
    %12 = vector.broadcast %11 : f32 to vector<2x256xf32>
    %13 = vector.extract_strided_slice %0 {offsets = [0, 0], sizes = [2, 256], strides = [1, 1]} : vector<2x1024xf32> to vector<2x256xf32>
    %14 = vector.broadcast %7 : f32 to vector<2x256xf32>
    %15 = arith.mulf %14, %13 : vector<2x256xf32>
    %16 = vector.extract_strided_slice %0 {offsets = [0, 256], sizes = [2, 256], strides = [1, 1]} : vector<2x1024xf32> to vector<2x256xf32>
    %17 = vector.broadcast %8 : f32 to vector<2x256xf32>
    %18 = arith.mulf %17, %16 : vector<2x256xf32>
    %19 = vector.extract_strided_slice %0 {offsets = [0, 512], sizes = [2, 256], strides = [1, 1]} : vector<2x1024xf32> to vector<2x256xf32>
    %20 = vector.broadcast %9 : f32 to vector<2x256xf32>
    %21 = arith.mulf %20, %19 : vector<2x256xf32>
    %22 = vector.extract_strided_slice %0 {offsets = [0, 768], sizes = [2, 256], strides = [1, 1]} : vector<2x1024xf32> to vector<2x256xf32>
    %23 = vector.broadcast %10 : f32 to vector<2x256xf32>
    %24 = arith.mulf %23, %22 : vector<2x256xf32>
    %25 = arith.addf %12, %15 : vector<2x256xf32>
    %26 = arith.addf %25, %18 : vector<2x256xf32>
    %27 = arith.addf %26, %21 : vector<2x256xf32>
    %28 = arith.addf %27, %24 : vector<2x256xf32>
    %c0_3 = arith.constant 0 : index
    %c0_4 = arith.constant 0 : index
    %29 = vector.load %arg10[%c0_3, %c0_4] : memref<2x1024xf32, #tpu.memory_space<vmem>>, vector<2x256xf32>
    tpu.vector_store %arg10[%c0_3, %c0_4], %28 {strides = array<i32>} : memref<2x1024xf32, #tpu.memory_space<vmem>>, vector<2x256xf32>,
    %c1008_i32 = arith.constant 1008 : i32
    %30 = tpu.dynamic_rotate %2 by %c1008_i32 dim 1 : vector<2x1024xf32>, i32 -> vector<2x1024xf32>
    %31 = arith.maximumf %2, %30 : vector<2x1024xf32>
    %32 = vector.extract_strided_slice %31 {offsets = [0, 0], sizes = [2, 256], strides = [1, 1]} : vector<2x1024xf32> to vector<2x256xf32>
    %33 = vector.broadcast %7 : f32 to vector<2x256xf32>
    %34 = arith.mulf %33, %32 : vector<2x256xf32>
    %35 = vector.extract_strided_slice %31 {offsets = [0, 256], sizes = [2, 256], strides = [1, 1]} : vector<2x1024xf32> to vector<2x256xf32>
    %36 = vector.broadcast %8 : f32 to vector<2x256xf32>
    %37 = arith.mulf %36, %35 : vector<2x256xf32>
    %38 = vector.extract_strided_slice %31 {offsets = [0, 512], sizes = [2, 256], strides = [1, 1]} : vector<2x1024xf32> to vector<2x256xf32>
    %39 = vector.broadcast %9 : f32 to vector<2x256xf32>
    %40 = arith.mulf %39, %38 : vector<2x256xf32>
    %41 = vector.extract_strided_slice %31 {offsets = [0, 768], sizes = [2, 256], strides = [1, 1]} : vector<2x1024xf32> to vector<2x256xf32>
    %42 = vector.broadcast %10 : f32 to vector<2x256xf32>
    %43 = arith.mulf %42, %41 : vector<2x256xf32>
    %44 = arith.addf %12, %34 : vector<2x256xf32>
    %45 = arith.addf %44, %37 : vector<2x256xf32>
    %46 = arith.addf %45, %40 : vector<2x256xf32>
    %47 = arith.addf %46, %43 : vector<2x256xf32>
    %c0_5 = arith.constant 0 : index
    %c0_6 = arith.constant 0 : index
    %48 = vector.load %arg4[%c0_5, %c0_6] : memref<256x64xf32, #tpu.memory_space<vmem>>, vector<256x64xf32>
    %cst = arith.constant dense<0.000000e+00> : vector<2x64xf32>
    %49 = tpu.matmul %47, %48, %cst {dimension_numbers = #tpu.dot_dimension_numbers<[1], [0], [0], [1], [0, 0, 1, 1], [], []>} : vector<2x256xf32>, vector<256x64xf32>, vector<2x64xf32> -> vector<2x64xf32>
    %c0_7 = arith.constant 0 : index
    %c0_8 = arith.constant 0 : index
    %50 = vector.load %arg5[%c0_7, %c0_8] : memref<64x256xf32, #tpu.memory_space<vmem>>, vector<64x256xf32>
    %cst_9 = arith.constant dense<0.000000e+00> : vector<2x256xf32>
    %51 = tpu.matmul %49, %50, %cst_9 {dimension_numbers = #tpu.dot_dimension_numbers<[1], [0], [0], [1], [0, 0, 1, 1], [], []>} : vector<2x64xf32>, vector<64x256xf32>, vector<2x256xf32> -> vector<2x256xf32>
    %c0_10 = arith.constant 0 : index
    %c256 = arith.constant 256 : index
    %52 = vector.load %arg10[%c0_10, %c256] : memref<2x1024xf32, #tpu.memory_space<vmem>>, vector<2x256xf32>
    tpu.vector_store %arg10[%c0_10, %c256], %51 {strides = array<i32>} : memref<2x1024xf32, #tpu.memory_space<vmem>>, vector<2x256xf32>,
    %c1008_i32_11 = arith.constant 1008 : i32
    %53 = tpu.dynamic_rotate %4 by %c1008_i32_11 dim 1 : vector<2x1024xf32>, i32 -> vector<2x1024xf32>
    %54 = arith.maximumf %4, %53 : vector<2x1024xf32>
    %c1008_i32_12 = arith.constant 1008 : i32
    %55 = tpu.dynamic_rotate %54 by %c1008_i32_12 dim 1 : vector<2x1024xf32>, i32 -> vector<2x1024xf32>
    %56 = arith.maximumf %54, %55 : vector<2x1024xf32>
    %57 = vector.extract_strided_slice %56 {offsets = [0, 0], sizes = [2, 256], strides = [1, 1]} : vector<2x1024xf32> to vector<2x256xf32>
    %58 = vector.broadcast %7 : f32 to vector<2x256xf32>
    %59 = arith.mulf %58, %57 : vector<2x256xf32>
    %60 = vector.extract_strided_slice %56 {offsets = [0, 256], sizes = [2, 256], strides = [1, 1]} : vector<2x1024xf32> to vector<2x256xf32>
    %61 = vector.broadcast %8 : f32 to vector<2x256xf32>
    %62 = arith.mulf %61, %60 : vector<2x256xf32>
    %63 = vector.extract_strided_slice %56 {offsets = [0, 512], sizes = [2, 256], strides = [1, 1]} : vector<2x1024xf32> to vector<2x256xf32>
    %64 = vector.broadcast %9 : f32 to vector<2x256xf32>
    %65 = arith.mulf %64, %63 : vector<2x256xf32>
    %66 = vector.extract_strided_slice %56 {offsets = [0, 768], sizes = [2, 256], strides = [1, 1]} : vector<2x1024xf32> to vector<2x256xf32>
    %67 = vector.broadcast %10 : f32 to vector<2x256xf32>
    %68 = arith.mulf %67, %66 : vector<2x256xf32>
    %69 = arith.addf %12, %59 : vector<2x256xf32>
    %70 = arith.addf %69, %62 : vector<2x256xf32>
    %71 = arith.addf %70, %65 : vector<2x256xf32>
    %72 = arith.addf %71, %68 : vector<2x256xf32>
    %c0_13 = arith.constant 0 : index
    %c0_14 = arith.constant 0 : index
    %73 = vector.load %arg6[%c0_13, %c0_14] : memref<256x32xf32, #tpu.memory_space<vmem>>, vector<256x32xf32>
    %cst_15 = arith.constant dense<0.000000e+00> : vector<2x32xf32>
    %74 = tpu.matmul %72, %73, %cst_15 {dimension_numbers = #tpu.dot_dimension_numbers<[1], [0], [0], [1], [0, 0, 1, 1], [], []>} : vector<2x256xf32>, vector<256x32xf32>, vector<2x32xf32> -> vector<2x32xf32>
    %c0_16 = arith.constant 0 : index
    %c0_17 = arith.constant 0 : index
    %75 = vector.load %arg7[%c0_16, %c0_17] : memref<32x256xf32, #tpu.memory_space<vmem>>, vector<32x256xf32>
    %cst_18 = arith.constant dense<0.000000e+00> : vector<2x256xf32>
    %76 = tpu.matmul %74, %75, %cst_18 {dimension_numbers = #tpu.dot_dimension_numbers<[1], [0], [0], [1], [0, 0, 1, 1], [], []>} : vector<2x32xf32>, vector<32x256xf32>, vector<2x256xf32> -> vector<2x256xf32>
    %c0_19 = arith.constant 0 : index
    %c512 = arith.constant 512 : index
    %77 = vector.load %arg10[%c0_19, %c512] : memref<2x1024xf32, #tpu.memory_space<vmem>>, vector<2x256xf32>
    tpu.vector_store %arg10[%c0_19, %c512], %76 {strides = array<i32>} : memref<2x1024xf32, #tpu.memory_space<vmem>>, vector<2x256xf32>,
    %c1008_i32_20 = arith.constant 1008 : i32
    %78 = tpu.dynamic_rotate %6 by %c1008_i32_20 dim 1 : vector<2x1024xf32>, i32 -> vector<2x1024xf32>
    %79 = arith.maximumf %6, %78 : vector<2x1024xf32>
    %c992_i32 = arith.constant 992 : i32
    %80 = tpu.dynamic_rotate %79 by %c992_i32 dim 1 : vector<2x1024xf32>, i32 -> vector<2x1024xf32>
    %81 = arith.maximumf %79, %80 : vector<2x1024xf32>
    %c992_i32_21 = arith.constant 992 : i32
    %82 = tpu.dynamic_rotate %81 by %c992_i32_21 dim 1 : vector<2x1024xf32>, i32 -> vector<2x1024xf32>
    %83 = arith.maximumf %81, %82 : vector<2x1024xf32>
    %84 = vector.extract_strided_slice %83 {offsets = [0, 0], sizes = [2, 256], strides = [1, 1]} : vector<2x1024xf32> to vector<2x256xf32>
    %85 = vector.broadcast %7 : f32 to vector<2x256xf32>
    %86 = arith.mulf %85, %84 : vector<2x256xf32>
    %87 = vector.extract_strided_slice %83 {offsets = [0, 256], sizes = [2, 256], strides = [1, 1]} : vector<2x1024xf32> to vector<2x256xf32>
    %88 = vector.broadcast %8 : f32 to vector<2x256xf32>
    %89 = arith.mulf %88, %87 : vector<2x256xf32>
    %90 = vector.extract_strided_slice %83 {offsets = [0, 512], sizes = [2, 256], strides = [1, 1]} : vector<2x1024xf32> to vector<2x256xf32>
    %91 = vector.broadcast %9 : f32 to vector<2x256xf32>
    %92 = arith.mulf %91, %90 : vector<2x256xf32>
    %93 = vector.extract_strided_slice %83 {offsets = [0, 768], sizes = [2, 256], strides = [1, 1]} : vector<2x1024xf32> to vector<2x256xf32>
    %94 = vector.broadcast %10 : f32 to vector<2x256xf32>
    %95 = arith.mulf %94, %93 : vector<2x256xf32>
    %96 = arith.addf %12, %86 : vector<2x256xf32>
    %97 = arith.addf %96, %89 : vector<2x256xf32>
    %98 = arith.addf %97, %92 : vector<2x256xf32>
    %99 = arith.addf %98, %95 : vector<2x256xf32>
    %c0_22 = arith.constant 0 : index
    %c0_23 = arith.constant 0 : index
    %100 = vector.load %arg8[%c0_22, %c0_23] : memref<256x8xf32, #tpu.memory_space<vmem>>, vector<256x8xf32>
    %cst_24 = arith.constant dense<0.000000e+00> : vector<2x8xf32>
    %101 = tpu.matmul %99, %100, %cst_24 {dimension_numbers = #tpu.dot_dimension_numbers<[1], [0], [0], [1], [0, 0, 1, 1], [], []>} : vector<2x256xf32>, vector<256x8xf32>, vector<2x8xf32> -> vector<2x8xf32>
    %c0_25 = arith.constant 0 : index
    %c0_26 = arith.constant 0 : index
    %102 = vector.load %arg9[%c0_25, %c0_26] : memref<8x256xf32, #tpu.memory_space<vmem>>, vector<8x256xf32>
    %cst_27 = arith.constant dense<0.000000e+00> : vector<2x256xf32>
    %103 = tpu.matmul %101, %102, %cst_27 {dimension_numbers = #tpu.dot_dimension_numbers<[1], [0], [0], [1], [0, 0, 1, 1], [], []>} : vector<2x8xf32>, vector<8x256xf32>, vector<2x256xf32> -> vector<2x256xf32>
    %c0_28 = arith.constant 0 : index
    %c768 = arith.constant 768 : index
    %104 = vector.load %arg10[%c0_28, %c768] : memref<2x1024xf32, #tpu.memory_space<vmem>>, vector<2x256xf32>
    tpu.vector_store %arg10[%c0_28, %c768], %103 {strides = array<i32>} : memref<2x1024xf32, #tpu.memory_space<vmem>>, vector<2x256xf32>,
    return
  }
  func.func @transform_0(%arg0: i32) -> (i32, i32) {
    %c0_i32 = arith.constant 0 : i32
    %c0_i32_0 = arith.constant 0 : i32
    return %arg0, %c0_i32 : i32, i32
  }
  func.func @transform_1(%arg0: i32) -> i32 {
    %c0_i32 = arith.constant 0 : i32
    %c0_i32_0 = arith.constant 0 : i32
    return %c0_i32 : i32
  }
  func.func @transform_2(%arg0: i32) -> i32 {
    %c0_i32 = arith.constant 0 : i32
    %c0_i32_0 = arith.constant 0 : i32
    return %c0_i32 : i32
  }
  func.func @transform_3(%arg0: i32) -> (i32, i32) {
    %c0_i32 = arith.constant 0 : i32
    %c0_i32_0 = arith.constant 0 : i32
    %c0_i32_1 = arith.constant 0 : i32
    return %c0_i32, %c0_i32_0 : i32, i32
  }
  func.func @transform_4(%arg0: i32) -> (i32, i32) {
    %c0_i32 = arith.constant 0 : i32
    %c0_i32_0 = arith.constant 0 : i32
    %c0_i32_1 = arith.constant 0 : i32
    return %c0_i32, %c0_i32_0 : i32, i32
  }
  func.func @transform_5(%arg0: i32) -> (i32, i32) {
    %c0_i32 = arith.constant 0 : i32
    %c0_i32_0 = arith.constant 0 : i32
    %c0_i32_1 = arith.constant 0 : i32
    return %c0_i32, %c0_i32_0 : i32, i32
  }
  func.func @transform_6(%arg0: i32) -> (i32, i32) {
    %c0_i32 = arith.constant 0 : i32
    %c0_i32_0 = arith.constant 0 : i32
    %c0_i32_1 = arith.constant 0 : i32
    return %c0_i32, %c0_i32_0 : i32, i32
  }
  func.func @transform_7(%arg0: i32) -> (i32, i32) {
    %c0_i32 = arith.constant 0 : i32
    %c0_i32_0 = arith.constant 0 : i32
    %c0_i32_1 = arith.constant 0 : i32
    return %c0_i32, %c0_i32_0 : i32, i32
  }
  func.func @transform_8(%arg0: i32) -> (i32, i32) {
    %c0_i32 = arith.constant 0 : i32
    %c0_i32_0 = arith.constant 0 : i32
    %c0_i32_1 = arith.constant 0 : i32
    return %c0_i32, %c0_i32_0 : i32, i32
  }
  func.func @transform_9(%arg0: i32) -> (i32, i32) {
    %c0_i32 = arith.constant 0 : i32
    %c0_i32_0 = arith.constant 0 : i32
    return %arg0, %c0_i32 : i32, i32
  }
}

</mosaic_0001>

<llo_original>
// kernel: tpu_custom_call.1
$region0: #{tpu_custom_call.1}
  #allocation0 [shape = 'u32[]', space=smem, size = 0x4, offset = 0x4, fixed_abs, tag = 'smem constant byte address 0x4 - core index']
  #allocation1 [shape = 'u32[144,128]{1,0:T(1,128)}', space=vmem, size = 0x12000, scoped, tag = 'internal scratch']
  #allocation2 [shape = 'f32[1]{0:T(128)S(6)}', space=smem, size = 0x200, scoped, tag = 'scoped memory for tpu_custom_call.1']
  %s0 = inlined_call_operand.vmem [shape: f32[2,1024], index: 0, kind: input, shape index: {}]
  %s1 = inlined_call_operand.vmem [shape: f32[4], index: 1, kind: input, shape index: {}]
  %s2 = inlined_call_operand.<no memory space> [shape: f32[1], index: 2, kind: input, shape index: {}]
  %s3 = inlined_call_operand.vmem [shape: f32[256,64], index: 3, kind: input, shape index: {}]
  %s4 = inlined_call_operand.vmem [shape: f32[64,256], index: 4, kind: input, shape index: {}]
  %s5 = inlined_call_operand.vmem [shape: f32[256,32], index: 5, kind: input, shape index: {}]
  %s6 = inlined_call_operand.vmem [shape: f32[32,256], index: 6, kind: input, shape index: {}]
  %s7 = inlined_call_operand.vmem [shape: f32[256,8], index: 7, kind: input, shape index: {}]
  %s8 = inlined_call_operand.vmem [shape: f32[8,256], index: 8, kind: input, shape index: {}]
  %s9 = inlined_call_operand.hbm [shape: f32[2,1024], index: 9, kind: output, shape index: {}]
  %s10 = sld [smem:[#allocation0]]
  $region50: #{tpu_custom_call.1} parent=0
    _
  %s12 = ssub.s32 1, %s10
  %s13 = scalar_select 0, %s12, %s10
  %14 = sst [smem:[#allocation2]] %s2
  $region1: #{tpu_custom_call.1} parent=0
    #allocation3 [shape = 'u8[512]{0}', space=smem, size = 0x200, scoped, tag = 'input window, operand 1, single buffered']
    #allocation4 [shape = 's32[1]{0}', space=sflag, size = 0x4, scoped, tag = 'scoped memory for tpu_custom_call.1']
    #allocation5 [shape = 's32[1]{0}', space=sflag, size = 0x4, scoped, tag = 'scoped memory for tpu_custom_call.1']
    #allocation6 [shape = 'u8[8192]{0}', space=vmem, size = 0x2000, scoped, tag = 'output window, operand 0, single buffered']
    %15 = vsyncpa [#allocation5], 0
    %16 = vsyncpa [#allocation4], 0
    // Predicated region
    $region2: #{tpu_custom_call.1} parent=1 // pred_check
      _
    $region3: #{tpu_custom_call.1} parent=1 // pred_check_branch
      %18 = sbr.rel (0) target = $region5
    $region4: #{tpu_custom_call.1} parent=1 // pred_region
      _
    $region5: #{tpu_custom_call.1} parent=1 // pred_fallthru
      _
    // Predicated region
    $region6: #{tpu_custom_call.1} parent=1 // pred_check
      _
    $region7: #{tpu_custom_call.1} parent=1 // pred_check_branch
      %20 = sbr.rel (0) target = $region9
    $region8: #{tpu_custom_call.1} parent=1 // pred_region
      %s22 = ssub.s32 16, 16
      %23 = vsyncadd [#allocation5], %s22
      %s25 = sshll.u32 %s1, 4
      %s26 = int_to_ptr.vmem [resolvable:$true] %s25
      %28 = dma.vmem_to_smem %s26, 16, [#allocation3], [#allocation5]
    $region9: #{tpu_custom_call.1} parent=1 // pred_fallthru
      _
    // Predicated region
    $region10: #{tpu_custom_call.1} parent=1 // pred_check
      _
    $region11: #{tpu_custom_call.1} parent=1 // pred_check_branch
      %30 = sbr.rel (0) target = $region13
    $region12: #{tpu_custom_call.1} parent=1 // pred_region
      _
    $region13: #{tpu_custom_call.1} parent=1 // pred_fallthru
      _
    // Predicated region
    $region14: #{tpu_custom_call.1} parent=1 // pred_check
      _
    $region15: #{tpu_custom_call.1} parent=1 // pred_check_branch
      %32 = sbr.rel (0) target = $region17
    $region16: #{tpu_custom_call.1} parent=1 // pred_region
      _
    $region17: #{tpu_custom_call.1} parent=1 // pred_fallthru
      _
    // Predicated region
    $region18: #{tpu_custom_call.1} parent=1 // pred_check
      _
    $region19: #{tpu_custom_call.1} parent=1 // pred_check_branch
      %34 = sbr.rel (0) target = $region21
    $region20: #{tpu_custom_call.1} parent=1 // pred_region
      _
    $region21: #{tpu_custom_call.1} parent=1 // pred_fallthru
      _
    // Predicated region
    $region22: #{tpu_custom_call.1} parent=1 // pred_check
      _
    $region23: #{tpu_custom_call.1} parent=1 // pred_check_branch
      %36 = sbr.rel (0) target = $region25
    $region24: #{tpu_custom_call.1} parent=1 // pred_region
      _
    $region25: #{tpu_custom_call.1} parent=1 // pred_fallthru
      _
    // Predicated region
    $region26: #{tpu_custom_call.1} parent=1 // pred_check
      _
    $region27: #{tpu_custom_call.1} parent=1 // pred_check_branch
      %38 = sbr.rel (0) target = $region29
    $region28: #{tpu_custom_call.1} parent=1 // pred_region
      _
    $region29: #{tpu_custom_call.1} parent=1 // pred_fallthru
      _
    // Predicated region
    $region30: #{tpu_custom_call.1} parent=1 // pred_check
      _
    $region31: #{tpu_custom_call.1} parent=1 // pred_check_branch
      %40 = sbr.rel (0) target = $region33
    $region32: #{tpu_custom_call.1} parent=1 // pred_region
      _
    $region33: #{tpu_custom_call.1} parent=1 // pred_fallthru
      _
    // Predicated region
    $region34: #{tpu_custom_call.1} parent=1 // pred_check
      _
    $region35: #{tpu_custom_call.1} parent=1 // pred_check_branch
      %42 = sbr.rel (0) target = $region37
    $region36: #{tpu_custom_call.1} parent=1 // pred_region
      _
    $region37: #{tpu_custom_call.1} parent=1 // pred_fallthru
      _
    // Predicated region
    $region38: #{tpu_custom_call.1} parent=1 // pred_check
      _
    $region39: #{tpu_custom_call.1} parent=1 // pred_check_branch
      %44 = sbr.rel (0) target = $region41
    $region40: #{tpu_custom_call.1} parent=1 // pred_region
      %45 = dma.done [#allocation5], 16
    $region41: #{tpu_custom_call.1} parent=1 // pred_fallthru
      _
    %46 = sfence
    %v47 = vld [vmem:[%s0] sm:$0xff]
    %v48 = vld [vmem:[%s0 + $0x8] sm:$0xff]
    %v51 = vcombine.high %v47, %v47
    %v53 = vunpack.c.l.s4 1983009808
    %v54 = vunpack.c.0.s8 %v53
    %v55 = vlaneseq
    %v56 = vshrl.u32 %v55, 7
    %v57 = vsub.s32 %v54, %v56
    %v58 = vrot.slane %v47, %v57
    %v60 = vunpack.c.l.s4 1983009808
    %v61 = vunpack.c.0.s8 %v60
    %v62 = vlaneseq
    %v63 = vshrl.u32 %v62, 7
    %v64 = vsub.s32 %v61, %v63
    %v65 = vrot.slane %v51, %v64
    %v66 = vcombine.high %v58, %v58
    %v67 = vcombine.high %v65, %v65
    %v68 = vcombine.high %v48, %v48
    %v70 = vunpack.c.l.s4 1983009808
    %v71 = vunpack.c.0.s8 %v70
    %v72 = vlaneseq
    %v73 = vshrl.u32 %v72, 7
    %v74 = vsub.s32 %v71, %v73
    %v75 = vrot.slane %v48, %v74
    %v77 = vunpack.c.l.s4 1983009808
    %v78 = vunpack.c.0.s8 %v77
    %v79 = vlaneseq
    %v80 = vshrl.u32 %v79, 7
    %v81 = vsub.s32 %v78, %v80
    %v82 = vrot.slane %v68, %v81
    %v83 = vcombine.high %v75, %v75
    %v84 = vcombine.high %v82, %v82
    %93 = vrot.lane.b32.xlu0 %v58, 127
    %v94 = vpop.permute.xlu0 %93
    %95 = vrot.lane.b32.xlu0 %v66, 127
    %v96 = vpop.permute.xlu0 %95
    %97 = vrot.lane.b32.xlu0 %v65, 127
    %v98 = vpop.permute.xlu0 %97
    %99 = vrot.lane.b32.xlu0 %v67, 127
    %v100 = vpop.permute.xlu0 %99
    %101 = vrot.lane.b32.xlu0 %v75, 127
    %v102 = vpop.permute.xlu0 %101
    %103 = vrot.lane.b32.xlu0 %v83, 127
    %v104 = vpop.permute.xlu0 %103
    %105 = vrot.lane.b32.xlu0 %v82, 127
    %v106 = vpop.permute.xlu0 %105
    %107 = vrot.lane.b32.xlu0 %v84, 127
    %v108 = vpop.permute.xlu0 %107
    %v109 = vlaneseq
    %v110 = vand.u32 %v109, 127
    %vm111 = vcmp.lt.s32.totalorder %v110, 127
    %v112 = vsel %vm111, %v106, %v108
    %v113 = vsel %vm111, %v104, %v106
    %v114 = vsel %vm111, %v102, %v104
    %v115 = vsel %vm111, %v100, %v102
    %v116 = vsel %vm111, %v98, %v100
    %v117 = vsel %vm111, %v96, %v98
    %v118 = vsel %vm111, %v94, %v96
    %v119 = vsel %vm111, %v108, %v94
    %v128 = vcombine.low %v118, %v117
    %v129 = vcombine.low %v116, %v115
    %v131 = vunpack.c.l.s4 1983009808
    %v132 = vunpack.c.0.s8 %v131
    %v133 = vlaneseq
    %v134 = vshrl.u32 %v133, 7
    %v135 = vsub.s32 %v132, %v134
    %v136 = vrot.slane %v128, %v135
    %v138 = vunpack.c.l.s4 1983009808
    %v139 = vunpack.c.0.s8 %v138
    %v140 = vlaneseq
    %v141 = vshrl.u32 %v140, 7
    %v142 = vsub.s32 %v139, %v141
    %v143 = vrot.slane %v129, %v142
    %v144 = vcombine.low %v136, %v143
    %v145 = vcombine.low %v114, %v113
    %v146 = vcombine.low %v112, %v119
    %v148 = vunpack.c.l.s4 1983009808
    %v149 = vunpack.c.0.s8 %v148
    %v150 = vlaneseq
    %v151 = vshrl.u32 %v150, 7
    %v152 = vsub.s32 %v149, %v151
    %v153 = vrot.slane %v145, %v152
    %v155 = vunpack.c.l.s4 1983009808
    %v156 = vunpack.c.0.s8 %v155
    %v157 = vlaneseq
    %v158 = vshrl.u32 %v157, 7
    %v159 = vsub.s32 %v156, %v158
    %v160 = vrot.slane %v146, %v159
    %v161 = vcombine.low %v153, %v160
    %v164 = vmax.f32 %v47, %v144
    %v165 = vmax.f32 %v48, %v161
    %166 = vrot.lane.b32.xlu0 %v58, 126
    %v167 = vpop.permute.xlu0 %166
    %168 = vrot.lane.b32.xlu0 %v66, 126
    %v169 = vpop.permute.xlu0 %168
    %170 = vrot.lane.b32.xlu0 %v65, 126
    %v171 = vpop.permute.xlu0 %170
    %172 = vrot.lane.b32.xlu0 %v67, 126
    %v173 = vpop.permute.xlu0 %172
    %174 = vrot.lane.b32.xlu0 %v75, 126
    %v175 = vpop.permute.xlu0 %174
    %176 = vrot.lane.b32.xlu0 %v83, 126
    %v177 = vpop.permute.xlu0 %176
    %178 = vrot.lane.b32.xlu0 %v82, 126
    %v179 = vpop.permute.xlu0 %178
    %180 = vrot.lane.b32.xlu0 %v84, 126
    %v181 = vpop.permute.xlu0 %180
    %vm182 = vcmp.lt.s32.totalorder %v110, 126
    %v183 = vsel %vm182, %v179, %v181
    %v184 = vsel %vm182, %v177, %v179
    %v185 = vsel %vm182, %v175, %v177
    %v186 = vsel %vm182, %v173, %v175
    %v187 = vsel %vm182, %v171, %v173
    %v188 = vsel %vm182, %v169, %v171
    %v189 = vsel %vm182, %v167, %v169
    %v190 = vsel %vm182, %v181, %v167
    %v199 = vcombine.low %v189, %v188
    %v200 = vcombine.low %v187, %v186
    %v202 = vunpack.c.l.s4 1983009808
    %v203 = vunpack.c.0.s8 %v202
    %v204 = vlaneseq
    %v205 = vshrl.u32 %v204, 7
    %v206 = vsub.s32 %v203, %v205
    %v207 = vrot.slane %v199, %v206
    %v209 = vunpack.c.l.s4 1983009808
    %v210 = vunpack.c.0.s8 %v209
    %v211 = vlaneseq
    %v212 = vshrl.u32 %v211, 7
    %v213 = vsub.s32 %v210, %v212
    %v214 = vrot.slane %v200, %v213
    %v215 = vcombine.low %v207, %v214
    %v216 = vcombine.low %v185, %v184
    %v217 = vcombine.low %v183, %v190
    %v219 = vunpack.c.l.s4 1983009808
    %v220 = vunpack.c.0.s8 %v219
    %v221 = vlaneseq
    %v222 = vshrl.u32 %v221, 7
    %v223 = vsub.s32 %v220, %v222
    %v224 = vrot.slane %v216, %v223
    %v226 = vunpack.c.l.s4 1983009808
    %v227 = vunpack.c.0.s8 %v226
    %v228 = vlaneseq
    %v229 = vshrl.u32 %v228, 7
    %v230 = vsub.s32 %v227, %v229
    %v231 = vrot.slane %v217, %v230
    %v232 = vcombine.low %v224, %v231
    %v235 = vmax.f32 %v164, %v215
    %v236 = vmax.f32 %v165, %v232
    %v239 = vcombine.high %v235, %v235
    %v241 = vunpack.c.l.s4 1983009808
    %v242 = vunpack.c.0.s8 %v241
    %v243 = vlaneseq
    %v244 = vshrl.u32 %v243, 7
    %v245 = vsub.s32 %v242, %v244
    %v246 = vrot.slane %v235, %v245
    %v248 = vunpack.c.l.s4 1983009808
    %v249 = vunpack.c.0.s8 %v248
    %v250 = vlaneseq
    %v251 = vshrl.u32 %v250, 7
    %v252 = vsub.s32 %v249, %v251
    %v253 = vrot.slane %v239, %v252
    %v254 = vcombine.high %v246, %v246
    %v255 = vcombine.high %v253, %v253
    %v256 = vcombine.high %v236, %v236
    %v258 = vunpack.c.l.s4 1983009808
    %v259 = vunpack.c.0.s8 %v258
    %v260 = vlaneseq
    %v261 = vshrl.u32 %v260, 7
    %v262 = vsub.s32 %v259, %v261
    %v263 = vrot.slane %v236, %v262
    %v265 = vunpack.c.l.s4 1983009808
    %v266 = vunpack.c.0.s8 %v265
    %v267 = vlaneseq
    %v268 = vshrl.u32 %v267, 7
    %v269 = vsub.s32 %v266, %v268
    %v270 = vrot.slane %v256, %v269
    %v271 = vcombine.high %v263, %v263
    %v272 = vcombine.high %v270, %v270
    %281 = vrot.lane.b32.xlu0 %v246, 125
    %v282 = vpop.permute.xlu0 %281
    %283 = vrot.lane.b32.xlu0 %v254, 125
    %v284 = vpop.permute.xlu0 %283
    %285 = vrot.lane.b32.xlu0 %v253, 125
    %v286 = vpop.permute.xlu0 %285
    %287 = vrot.lane.b32.xlu0 %v255, 125
    %v288 = vpop.permute.xlu0 %287
    %289 = vrot.lane.b32.xlu0 %v263, 125
    %v290 = vpop.permute.xlu0 %289
    %291 = vrot.lane.b32.xlu0 %v271, 125
    %v292 = vpop.permute.xlu0 %291
    %293 = vrot.lane.b32.xlu0 %v270, 125
    %v294 = vpop.permute.xlu0 %293
    %295 = vrot.lane.b32.xlu0 %v272, 125
    %v296 = vpop.permute.xlu0 %295
    %vm297 = vcmp.lt.s32.totalorder %v110, 125
    %v298 = vsel %vm297, %v294, %v296
    %v299 = vsel %vm297, %v292, %v294
    %v300 = vsel %vm297, %v290, %v292
    %v301 = vsel %vm297, %v288, %v290
    %v302 = vsel %vm297, %v286, %v288
    %v303 = vsel %vm297, %v284, %v286
    %v304 = vsel %vm297, %v282, %v284
    %v305 = vsel %vm297, %v296, %v282
    %v314 = vcombine.low %v304, %v303
    %v315 = vcombine.low %v302, %v301
    %v317 = vunpack.c.l.s4 1983009808
    %v318 = vunpack.c.0.s8 %v317
    %v319 = vlaneseq
    %v320 = vshrl.u32 %v319, 7
    %v321 = vsub.s32 %v318, %v320
    %v322 = vrot.slane %v314, %v321
    %v324 = vunpack.c.l.s4 1983009808
    %v325 = vunpack.c.0.s8 %v324
    %v326 = vlaneseq
    %v327 = vshrl.u32 %v326, 7
    %v328 = vsub.s32 %v325, %v327
    %v329 = vrot.slane %v315, %v328
    %v330 = vcombine.low %v322, %v329
    %v331 = vcombine.low %v300, %v299
    %v332 = vcombine.low %v298, %v305
    %v334 = vunpack.c.l.s4 1983009808
    %v335 = vunpack.c.0.s8 %v334
    %v336 = vlaneseq
    %v337 = vshrl.u32 %v336, 7
    %v338 = vsub.s32 %v335, %v337
    %v339 = vrot.slane %v331, %v338
    %v341 = vunpack.c.l.s4 1983009808
    %v342 = vunpack.c.0.s8 %v341
    %v343 = vlaneseq
    %v344 = vshrl.u32 %v343, 7
    %v345 = vsub.s32 %v342, %v344
    %v346 = vrot.slane %v332, %v345
    %v347 = vcombine.low %v339, %v346
    %v350 = vmax.f32 %v235, %v330
    %v351 = vmax.f32 %v236, %v347
    %s352 = sld [smem:[#allocation3]]
    %s353 = sld [smem:[#allocation3 + $0x1]]
    %s354 = sld [smem:[#allocation3 + $0x2]]
    %s355 = sld [smem:[#allocation3 + $0x3]]
    %s356 = sld [smem:[#allocation2]]
    %v357 = vstv %s356
    %v358 = vstv %s352
    %v359 = vmul.f32 %v358, %v47
    %v360 = vstv %s353
    %v361 = vrot.slane %v47, 4
    %v363 = vmul.f32 %v360, %v361
    %v364 = vstv %s354
    %v365 = vmul.f32 %v364, %v48
    %v366 = vstv %s355
    %v367 = vrot.slane %v48, 4
    %v369 = vmul.f32 %v366, %v367
    %v370 = vadd.f32 %v357, %v359
    %v371 = vadd.f32 %v370, %v363
    %v372 = vadd.f32 %v371, %v365
    %v373 = vadd.f32 %v372, %v369
    %374 = vst [vmem:[#allocation6] sm:$0xf] %v373
    %v377 = vcombine.high %v164, %v164
    %v379 = vunpack.c.l.s4 1983009808
    %v380 = vunpack.c.0.s8 %v379
    %v381 = vlaneseq
    %v382 = vshrl.u32 %v381, 7
    %v383 = vsub.s32 %v380, %v382
    %v384 = vrot.slane %v164, %v383
    %v386 = vunpack.c.l.s4 1983009808
    %v387 = vunpack.c.0.s8 %v386
    %v388 = vlaneseq
    %v389 = vshrl.u32 %v388, 7
    %v390 = vsub.s32 %v387, %v389
    %v391 = vrot.slane %v377, %v390
    %v392 = vcombine.high %v384, %v384
    %v393 = vcombine.high %v391, %v391
    %v394 = vcombine.high %v165, %v165
    %v396 = vunpack.c.l.s4 1983009808
    %v397 = vunpack.c.0.s8 %v396
    %v398 = vlaneseq
    %v399 = vshrl.u32 %v398, 7
    %v400 = vsub.s32 %v397, %v399
    %v401 = vrot.slane %v165, %v400
    %v403 = vunpack.c.l.s4 1983009808
    %v404 = vunpack.c.0.s8 %v403
    %v405 = vlaneseq
    %v406 = vshrl.u32 %v405, 7
    %v407 = vsub.s32 %v404, %v406
    %v408 = vrot.slane %v394, %v407
    %v409 = vcombine.high %v401, %v401
    %v410 = vcombine.high %v408, %v408
    %419 = vrot.lane.b32.xlu0 %v384, 112
    %v420 = vpop.permute.xlu0 %419
    %421 = vrot.lane.b32.xlu0 %v392, 112
    %v422 = vpop.permute.xlu0 %421
    %423 = vrot.lane.b32.xlu0 %v391, 112
    %v424 = vpop.permute.xlu0 %423
    %425 = vrot.lane.b32.xlu0 %v393, 112
    %v426 = vpop.permute.xlu0 %425
    %427 = vrot.lane.b32.xlu0 %v401, 112
    %v428 = vpop.permute.xlu0 %427
    %429 = vrot.lane.b32.xlu0 %v409, 112
    %v430 = vpop.permute.xlu0 %429
    %431 = vrot.lane.b32.xlu0 %v408, 112
    %v432 = vpop.permute.xlu0 %431
    %433 = vrot.lane.b32.xlu0 %v410, 112
    %v434 = vpop.permute.xlu0 %433
    %vm435 = vcmp.lt.s32.totalorder %v110, 112
    %v436 = vsel %vm435, %v432, %v434
    %v437 = vsel %vm435, %v430, %v432
    %v438 = vsel %vm435, %v428, %v430
    %v439 = vsel %vm435, %v426, %v428
    %v440 = vsel %vm435, %v424, %v426
    %v441 = vsel %vm435, %v422, %v424
    %v442 = vsel %vm435, %v420, %v422
    %v443 = vsel %vm435, %v434, %v420
    %v452 = vcombine.low %v442, %v441
    %v453 = vcombine.low %v440, %v439
    %v455 = vunpack.c.l.s4 1983009808
    %v456 = vunpack.c.0.s8 %v455
    %v457 = vlaneseq
    %v458 = vshrl.u32 %v457, 7
    %v459 = vsub.s32 %v456, %v458
    %v460 = vrot.slane %v452, %v459
    %v462 = vunpack.c.l.s4 1983009808
    %v463 = vunpack.c.0.s8 %v462
    %v464 = vlaneseq
    %v465 = vshrl.u32 %v464, 7
    %v466 = vsub.s32 %v463, %v465
    %v467 = vrot.slane %v453, %v466
    %v468 = vcombine.low %v460, %v467
    %v469 = vcombine.low %v438, %v437
    %v470 = vcombine.low %v436, %v443
    %v472 = vunpack.c.l.s4 1983009808
    %v473 = vunpack.c.0.s8 %v472
    %v474 = vlaneseq
    %v475 = vshrl.u32 %v474, 7
    %v476 = vsub.s32 %v473, %v475
    %v477 = vrot.slane %v469, %v476
    %v479 = vunpack.c.l.s4 1983009808
    %v480 = vunpack.c.0.s8 %v479
    %v481 = vlaneseq
    %v482 = vshrl.u32 %v481, 7
    %v483 = vsub.s32 %v480, %v482
    %v484 = vrot.slane %v470, %v483
    %v485 = vcombine.low %v477, %v484
    %v488 = vmax.f32 %v164, %v468
    %v489 = vmax.f32 %v165, %v485
    %v490 = vmul.f32 %v358, %v488
    %v492 = vrot.slane %v488, 4
    %v494 = vmul.f32 %v360, %v492
    %v495 = vmul.f32 %v364, %v489
    %v497 = vrot.slane %v489, 4
    %v499 = vmul.f32 %v366, %v497
    %v500 = vadd.f32 %v357, %v490
    %v501 = vadd.f32 %v500, %v494
    %v502 = vadd.f32 %v501, %v495
    %v503 = vadd.f32 %v502, %v499
    %v504 = vld [vmem:[%s3] sm:$0xff]
    %v505 = vld [vmem:[%s3 + $0x8] sm:$0xff]
    %v506 = vld [vmem:[%s3 + $0x10] sm:$0xff]
    %v507 = vld [vmem:[%s3 + $0x18] sm:$0xff]
    %v508 = vld [vmem:[%s3 + $0x20] sm:$0xff]
    %v509 = vld [vmem:[%s3 + $0x28] sm:$0xff]
    %v510 = vld [vmem:[%s3 + $0x30] sm:$0xff]
    %v511 = vld [vmem:[%s3 + $0x38] sm:$0xff]
    %v512 = vld [vmem:[%s3 + $0x40] sm:$0xff]
    %v513 = vld [vmem:[%s3 + $0x48] sm:$0xff]
    %v514 = vld [vmem:[%s3 + $0x50] sm:$0xff]
    %v515 = vld [vmem:[%s3 + $0x58] sm:$0xff]
    %v516 = vld [vmem:[%s3 + $0x60] sm:$0xff]
    %v517 = vld [vmem:[%s3 + $0x68] sm:$0xff]
    %v518 = vld [vmem:[%s3 + $0x70] sm:$0xff]
    %v519 = vld [vmem:[%s3 + $0x78] sm:$0xff]
    %v520 = vld [vmem:[%s3 + $0x80] sm:$0xff]
    %v521 = vld [vmem:[%s3 + $0x88] sm:$0xff]
    %v522 = vld [vmem:[%s3 + $0x90] sm:$0xff]
    %v523 = vld [vmem:[%s3 + $0x98] sm:$0xff]
    %v524 = vld [vmem:[%s3 + $0xa0] sm:$0xff]
    %v525 = vld [vmem:[%s3 + $0xa8] sm:$0xff]
    %v526 = vld [vmem:[%s3 + $0xb0] sm:$0xff]
    %v527 = vld [vmem:[%s3 + $0xb8] sm:$0xff]
    %v528 = vld [vmem:[%s3 + $0xc0] sm:$0xff]
    %v529 = vld [vmem:[%s3 + $0xc8] sm:$0xff]
    %v530 = vld [vmem:[%s3 + $0xd0] sm:$0xff]
    %v531 = vld [vmem:[%s3 + $0xd8] sm:$0xff]
    %v532 = vld [vmem:[%s3 + $0xe0] sm:$0xff]
    %v533 = vld [vmem:[%s3 + $0xe8] sm:$0xff]
    %v534 = vld [vmem:[%s3 + $0xf0] sm:$0xff]
    %v535 = vld [vmem:[%s3 + $0xf8] sm:$0xff]
    %v538 = vunpack.c.l.s4 1983009808
    %v539 = vunpack.c.0.s8 %v538
    %v540 = vlaneseq
    %v541 = vshrl.u32 %v540, 7
    %v542 = vsub.s32 %v539, %v541
    %v543 = vrot.slane %v503, %v542
    %v544 = vcombine.high %v543, %v543
    %547 = vmatprep.subr.mxu0 0.0
    %548 = vmatpush1.msra.mxu0 %v504
    %549 = vmatprep.subr.mxu0 0.0
    %550 = vmatpush1.msra.mxu0 %v505
    %551 = vmatprep.subr.mxu0 0.0
    %552 = vmatpush1.msra.mxu0 %v506
    %553 = vmatprep.subr.mxu0 0.0
    %554 = vmatpush1.msra.mxu0 %v507
    %555 = vmatprep.subr.mxu0 0.0
    %556 = vmatpush1.msra.mxu0 %v508
    %557 = vmatprep.subr.mxu0 0.0
    %558 = vmatpush1.msra.mxu0 %v509
    %559 = vmatprep.subr.mxu0 0.0
    %560 = vmatpush1.msra.mxu0 %v510
    %561 = vmatprep.subr.mxu0 0.0
    %562 = vmatpush1.msra.mxu0 %v511
    %563 = vmatprep.subr.mxu0 0.0
    %564 = vmatpush1.msra.mxu0 %v512
    %565 = vmatprep.subr.mxu0 0.0
    %566 = vmatpush1.msra.mxu0 %v513
    %567 = vmatprep.subr.mxu0 0.0
    %568 = vmatpush1.msra.mxu0 %v514
    %569 = vmatprep.subr.mxu0 0.0
    %570 = vmatpush1.msra.mxu0 %v515
    %571 = vmatprep.subr.mxu0 0.0
    %572 = vmatpush1.msra.mxu0 %v516
    %573 = vmatprep.subr.mxu0 0.0
    %574 = vmatpush1.msra.mxu0 %v517
    %575 = vmatprep.subr.mxu0 0.0
    %576 = vmatpush1.msra.mxu0 %v518
    %577 = vmatprep.subr.mxu0 0.0
    %578 = vmatpush1.msra.mxu0 %v519
    %579 = vmatprep.subr.mxu0 0.0
    %580 = vmatpush1.msra.mxu0 %v520
    %581 = vmatprep.subr.mxu0 0.0
    %582 = vmatpush1.msra.mxu0 %v521
    %583 = vmatprep.subr.mxu0 0.0
    %584 = vmatpush1.msra.mxu0 %v522
    %585 = vmatprep.subr.mxu0 0.0
    %586 = vmatpush1.msra.mxu0 %v523
    %587 = vmatprep.subr.mxu0 0.0
    %588 = vmatpush1.msra.mxu0 %v524
    %589 = vmatprep.subr.mxu0 0.0
    %590 = vmatpush1.msra.mxu0 %v525
    %591 = vmatprep.subr.mxu0 0.0
    %592 = vmatpush1.msra.mxu0 %v526
    %593 = vmatprep.subr.mxu0 0.0
    %594 = vmatpush1.msra.mxu0 %v527
    %595 = vmatprep.subr.mxu0 0.0
    %596 = vmatpush1.msra.mxu0 %v528
    %597 = vmatprep.subr.mxu0 0.0
    %598 = vmatpush1.msra.mxu0 %v529
    %599 = vmatprep.subr.mxu0 0.0
    %600 = vmatpush1.msra.mxu0 %v530
    %601 = vmatprep.subr.mxu0 0.0
    %602 = vmatpush1.msra.mxu0 %v531
    %603 = vmatprep.subr.mxu0 0.0
    %604 = vmatpush1.msra.mxu0 %v532
    %605 = vmatprep.subr.mxu0 0.0
    %606 = vmatpush1.msra.mxu0 %v533
    %607 = vmatprep.subr.mxu0 0.0
    %608 = vmatpush1.msra.mxu0 %v534
    %609 = vmatprep.subr.mxu0 0.0
    %610 = vmatpush1.msra.mxu0 %v535
    %611 = vmatprep.mubr.f32.mxu0 %v544
    %612 = vmatmul.mubr.f32.gmra.mrb[0].mxu0 %v543
    %v613 = vpop.f32.mrb[0].mxu0
    %v614 = vadd.f32 0.0, %v613
    %v615 = vpop.f32.mrb[0].mxu0
    %616 = vdwg.mxu0
    %v617 = vld [vmem:[%s4] sm:$0xff]
    %v618 = vld [vmem:[%s4 + $0x8] sm:$0xff]
    %v619 = vld [vmem:[%s4 + $0x10] sm:$0xff]
    %v620 = vld [vmem:[%s4 + $0x18] sm:$0xff]
    %v621 = vld [vmem:[%s4 + $0x20] sm:$0xff]
    %v622 = vld [vmem:[%s4 + $0x28] sm:$0xff]
    %v623 = vld [vmem:[%s4 + $0x30] sm:$0xff]
    %v624 = vld [vmem:[%s4 + $0x38] sm:$0xff]
    %v625 = vld [vmem:[%s4 + $0x40] sm:$0xff]
    %v626 = vld [vmem:[%s4 + $0x48] sm:$0xff]
    %v627 = vld [vmem:[%s4 + $0x50] sm:$0xff]
    %v628 = vld [vmem:[%s4 + $0x58] sm:$0xff]
    %v629 = vld [vmem:[%s4 + $0x60] sm:$0xff]
    %v630 = vld [vmem:[%s4 + $0x68] sm:$0xff]
    %v631 = vld [vmem:[%s4 + $0x70] sm:$0xff]
    %v632 = vld [vmem:[%s4 + $0x78] sm:$0xff]
    %vm633 = vcmask 523264
    %v635 = vsel %vm633, %v614, 0
    %637 = vmatprep.subr.mxu0 %v618
    %638 = vmatpush1.msra.mxu0 %v617
    %639 = vmatprep.subr.mxu0 %v620
    %640 = vmatpush1.msra.mxu0 %v619
    %641 = vmatprep.subr.mxu0 %v622
    %642 = vmatpush1.msra.mxu0 %v621
    %643 = vmatprep.subr.mxu0 %v624
    %644 = vmatpush1.msra.mxu0 %v623
    %645 = vmatprep.subr.mxu0 %v626
    %646 = vmatpush1.msra.mxu0 %v625
    %647 = vmatprep.subr.mxu0 %v628
    %648 = vmatpush1.msra.mxu0 %v627
    %649 = vmatprep.subr.mxu0 %v630
    %650 = vmatpush1.msra.mxu0 %v629
    %651 = vmatprep.subr.mxu0 %v632
    %652 = vmatpush1.msra.mxu0 %v631
    %653 = vmatprep.subr.mxu0 0.0
    %654 = vmatpush1.msra.mxu0 0.0
    %655 = vmatprep.subr.mxu0 0.0
    %656 = vmatpush1.msra.mxu0 0.0
    %657 = vmatprep.subr.mxu0 0.0
    %658 = vmatpush1.msra.mxu0 0.0
    %659 = vmatprep.subr.mxu0 0.0
    %660 = vmatpush1.msra.mxu0 0.0
    %661 = vmatprep.subr.mxu0 0.0
    %662 = vmatpush1.msra.mxu0 0.0
    %663 = vmatprep.subr.mxu0 0.0
    %664 = vmatpush1.msra.mxu0 0.0
    %665 = vmatprep.subr.mxu0 0.0
    %666 = vmatpush1.msra.mxu0 0.0
    %667 = vmatprep.subr.mxu0 0.0
    %668 = vmatpush1.msra.mxu0 0.0
    %669 = vmatprep.subr.mxu0 0.0
    %670 = vmatpush1.msra.mxu0 0.0
    %671 = vmatprep.subr.mxu0 0.0
    %672 = vmatpush1.msra.mxu0 0.0
    %673 = vmatprep.subr.mxu0 0.0
    %674 = vmatpush1.msra.mxu0 0.0
    %675 = vmatprep.subr.mxu0 0.0
    %676 = vmatpush1.msra.mxu0 0.0
    %677 = vmatprep.subr.mxu0 0.0
    %678 = vmatpush1.msra.mxu0 0.0
    %679 = vmatprep.subr.mxu0 0.0
    %680 = vmatpush1.msra.mxu0 0.0
    %681 = vmatprep.subr.mxu0 0.0
    %682 = vmatpush1.msra.mxu0 0.0
    %683 = vmatprep.subr.mxu0 0.0
    %684 = vmatpush1.msra.mxu0 0.0
    %685 = vmatprep.subr.mxu0 0.0
    %686 = vmatpush1.msra.mxu0 0.0
    %687 = vmatprep.subr.mxu0 0.0
    %688 = vmatpush1.msra.mxu0 0.0
    %689 = vmatprep.subr.mxu0 0.0
    %690 = vmatpush1.msra.mxu0 0.0
    %691 = vmatprep.subr.mxu0 0.0
    %692 = vmatpush1.msra.mxu0 0.0
    %693 = vmatprep.subr.mxu0 0.0
    %694 = vmatpush1.msra.mxu0 0.0
    %695 = vmatprep.subr.mxu0 0.0
    %696 = vmatpush1.msra.mxu0 0.0
    %697 = vmatprep.subr.mxu0 0.0
    %698 = vmatpush1.msra.mxu0 0.0
    %699 = vmatprep.subr.mxu0 0.0
    %700 = vmatpush1.msra.mxu0 0.0
    %701 = vmatprep.mubr.f32.mxu0 0.0
    %702 = vmatmul.mubr.f32.gmra.mrb[0].mxu0 %v635
    %v703 = vpop.f32.mrb[0].mxu0
    %v704 = vadd.f32 0.0, %v703
    %v705 = vpop.f32.mrb[0].mxu0
    %v706 = vadd.f32 0.0, %v705
    %707 = vdwg.mxu0
    %v710 = vcombine.low %v704, %v706
    %v712 = vunpack.c.l.s4 1983009808
    %v713 = vunpack.c.0.s8 %v712
    %v714 = vlaneseq
    %v715 = vshrl.u32 %v714, 7
    %v716 = vsub.s32 %v713, %v715
    %v717 = vrot.slane %v710, %v716
    %719 = vst [vmem:[#allocation6 + $0x4] sm:$0xf] %v717
    %720 = vrot.lane.b32.xlu0 %v246, 112
    %v721 = vpop.permute.xlu0 %720
    %722 = vrot.lane.b32.xlu0 %v254, 112
    %v723 = vpop.permute.xlu0 %722
    %724 = vrot.lane.b32.xlu0 %v253, 112
    %v725 = vpop.permute.xlu0 %724
    %726 = vrot.lane.b32.xlu0 %v255, 112
    %v727 = vpop.permute.xlu0 %726
    %728 = vrot.lane.b32.xlu0 %v263, 112
    %v729 = vpop.permute.xlu0 %728
    %730 = vrot.lane.b32.xlu0 %v271, 112
    %v731 = vpop.permute.xlu0 %730
    %732 = vrot.lane.b32.xlu0 %v270, 112
    %v733 = vpop.permute.xlu0 %732
    %734 = vrot.lane.b32.xlu0 %v272, 112
    %v735 = vpop.permute.xlu0 %734
    %v736 = vsel %vm435, %v733, %v735
    %v737 = vsel %vm435, %v731, %v733
    %v738 = vsel %vm435, %v729, %v731
    %v739 = vsel %vm435, %v727, %v729
    %v740 = vsel %vm435, %v725, %v727
    %v741 = vsel %vm435, %v723, %v725
    %v742 = vsel %vm435, %v721, %v723
    %v743 = vsel %vm435, %v735, %v721
    %v752 = vcombine.low %v742, %v741
    %v753 = vcombine.low %v740, %v739
    %v755 = vunpack.c.l.s4 1983009808
    %v756 = vunpack.c.0.s8 %v755
    %v757 = vlaneseq
    %v758 = vshrl.u32 %v757, 7
    %v759 = vsub.s32 %v756, %v758
    %v760 = vrot.slane %v752, %v759
    %v762 = vunpack.c.l.s4 1983009808
    %v763 = vunpack.c.0.s8 %v762
    %v764 = vlaneseq
    %v765 = vshrl.u32 %v764, 7
    %v766 = vsub.s32 %v763, %v765
    %v767 = vrot.slane %v753, %v766
    %v768 = vcombine.low %v760, %v767
    %v769 = vcombine.low %v738, %v737
    %v770 = vcombine.low %v736, %v743
    %v772 = vunpack.c.l.s4 1983009808
    %v773 = vunpack.c.0.s8 %v772
    %v774 = vlaneseq
    %v775 = vshrl.u32 %v774, 7
    %v776 = vsub.s32 %v773, %v775
    %v777 = vrot.slane %v769, %v776
    %v779 = vunpack.c.l.s4 1983009808
    %v780 = vunpack.c.0.s8 %v779
    %v781 = vlaneseq
    %v782 = vshrl.u32 %v781, 7
    %v783 = vsub.s32 %v780, %v782
    %v784 = vrot.slane %v770, %v783
    %v785 = vcombine.low %v777, %v784
    %v788 = vmax.f32 %v235, %v768
    %v789 = vmax.f32 %v236, %v785
    %v792 = vcombine.high %v788, %v788
    %v794 = vunpack.c.l.s4 1983009808
    %v795 = vunpack.c.0.s8 %v794
    %v796 = vlaneseq
    %v797 = vshrl.u32 %v796, 7
    %v798 = vsub.s32 %v795, %v797
    %v799 = vrot.slane %v788, %v798
    %v801 = vunpack.c.l.s4 1983009808
    %v802 = vunpack.c.0.s8 %v801
    %v803 = vlaneseq
    %v804 = vshrl.u32 %v803, 7
    %v805 = vsub.s32 %v802, %v804
    %v806 = vrot.slane %v792, %v805
    %v807 = vcombine.high %v799, %v799
    %v808 = vcombine.high %v806, %v806
    %v809 = vcombine.high %v789, %v789
    %v811 = vunpack.c.l.s4 1983009808
    %v812 = vunpack.c.0.s8 %v811
    %v813 = vlaneseq
    %v814 = vshrl.u32 %v813, 7
    %v815 = vsub.s32 %v812, %v814
    %v816 = vrot.slane %v789, %v815
    %v818 = vunpack.c.l.s4 1983009808
    %v819 = vunpack.c.0.s8 %v818
    %v820 = vlaneseq
    %v821 = vshrl.u32 %v820, 7
    %v822 = vsub.s32 %v819, %v821
    %v823 = vrot.slane %v809, %v822
    %v824 = vcombine.high %v816, %v816
    %v825 = vcombine.high %v823, %v823
    %834 = vrot.lane.b32.xlu0 %v799, 112
    %v835 = vpop.permute.xlu0 %834
    %836 = vrot.lane.b32.xlu0 %v807, 112
    %v837 = vpop.permute.xlu0 %836
    %838 = vrot.lane.b32.xlu0 %v806, 112
    %v839 = vpop.permute.xlu0 %838
    %840 = vrot.lane.b32.xlu0 %v808, 112
    %v841 = vpop.permute.xlu0 %840
    %842 = vrot.lane.b32.xlu0 %v816, 112
    %v843 = vpop.permute.xlu0 %842
    %844 = vrot.lane.b32.xlu0 %v824, 112
    %v845 = vpop.permute.xlu0 %844
    %846 = vrot.lane.b32.xlu0 %v823, 112
    %v847 = vpop.permute.xlu0 %846
    %848 = vrot.lane.b32.xlu0 %v825, 112
    %v849 = vpop.permute.xlu0 %848
    %v850 = vsel %vm435, %v847, %v849
    %v851 = vsel %vm435, %v845, %v847
    %v852 = vsel %vm435, %v843, %v845
    %v853 = vsel %vm435, %v841, %v843
    %v854 = vsel %vm435, %v839, %v841
    %v855 = vsel %vm435, %v837, %v839
    %v856 = vsel %vm435, %v835, %v837
    %v857 = vsel %vm435, %v849, %v835
    %v866 = vcombine.low %v856, %v855
    %v867 = vcombine.low %v854, %v853
    %v869 = vunpack.c.l.s4 1983009808
    %v870 = vunpack.c.0.s8 %v869
    %v871 = vlaneseq
    %v872 = vshrl.u32 %v871, 7
    %v873 = vsub.s32 %v870, %v872
    %v874 = vrot.slane %v866, %v873
    %v876 = vunpack.c.l.s4 1983009808
    %v877 = vunpack.c.0.s8 %v876
    %v878 = vlaneseq
    %v879 = vshrl.u32 %v878, 7
    %v880 = vsub.s32 %v877, %v879
    %v881 = vrot.slane %v867, %v880
    %v882 = vcombine.low %v874, %v881
    %v883 = vcombine.low %v852, %v851
    %v884 = vcombine.low %v850, %v857
    %v886 = vunpack.c.l.s4 1983009808
    %v887 = vunpack.c.0.s8 %v886
    %v888 = vlaneseq
    %v889 = vshrl.u32 %v888, 7
    %v890 = vsub.s32 %v887, %v889
    %v891 = vrot.slane %v883, %v890
    %v893 = vunpack.c.l.s4 1983009808
    %v894 = vunpack.c.0.s8 %v893
    %v895 = vlaneseq
    %v896 = vshrl.u32 %v895, 7
    %v897 = vsub.s32 %v894, %v896
    %v898 = vrot.slane %v884, %v897
    %v899 = vcombine.low %v891, %v898
    %v902 = vmax.f32 %v788, %v882
    %v903 = vmax.f32 %v789, %v899
    %v904 = vmul.f32 %v358, %v902
    %v906 = vrot.slane %v902, 4
    %v908 = vmul.f32 %v360, %v906
    %v909 = vmul.f32 %v364, %v903
    %v911 = vrot.slane %v903, 4
    %v913 = vmul.f32 %v366, %v911
    %v914 = vadd.f32 %v357, %v904
    %v915 = vadd.f32 %v914, %v908
    %v916 = vadd.f32 %v915, %v909
    %v917 = vadd.f32 %v916, %v913
    %v918 = vld [vmem:[%s5] sm:$0xff]
    %v919 = vld [vmem:[%s5 + $0x8] sm:$0xff]
    %v920 = vld [vmem:[%s5 + $0x10] sm:$0xff]
    %v921 = vld [vmem:[%s5 + $0x18] sm:$0xff]
    %v922 = vld [vmem:[%s5 + $0x20] sm:$0xff]
    %v923 = vld [vmem:[%s5 + $0x28] sm:$0xff]
    %v924 = vld [vmem:[%s5 + $0x30] sm:$0xff]
    %v925 = vld [vmem:[%s5 + $0x38] sm:$0xff]
    %v926 = vld [vmem:[%s5 + $0x40] sm:$0xff]
    %v927 = vld [vmem:[%s5 + $0x48] sm:$0xff]
    %v928 = vld [vmem:[%s5 + $0x50] sm:$0xff]
    %v929 = vld [vmem:[%s5 + $0x58] sm:$0xff]
    %v930 = vld [vmem:[%s5 + $0x60] sm:$0xff]
    %v931 = vld [vmem:[%s5 + $0x68] sm:$0xff]
    %v932 = vld [vmem:[%s5 + $0x70] sm:$0xff]
    %v933 = vld [vmem:[%s5 + $0x78] sm:$0xff]
    %v934 = vld [vmem:[%s5 + $0x80] sm:$0xff]
    %v935 = vld [vmem:[%s5 + $0x88] sm:$0xff]
    %v936 = vld [vmem:[%s5 + $0x90] sm:$0xff]
    %v937 = vld [vmem:[%s5 + $0x98] sm:$0xff]
    %v938 = vld [vmem:[%s5 + $0xa0] sm:$0xff]
    %v939 = vld [vmem:[%s5 + $0xa8] sm:$0xff]
    %v940 = vld [vmem:[%s5 + $0xb0] sm:$0xff]
    %v941 = vld [vmem:[%s5 + $0xb8] sm:$0xff]
    %v942 = vld [vmem:[%s5 + $0xc0] sm:$0xff]
    %v943 = vld [vmem:[%s5 + $0xc8] sm:$0xff]
    %v944 = vld [vmem:[%s5 + $0xd0] sm:$0xff]
    %v945 = vld [vmem:[%s5 + $0xd8] sm:$0xff]
    %v946 = vld [vmem:[%s5 + $0xe0] sm:$0xff]
    %v947 = vld [vmem:[%s5 + $0xe8] sm:$0xff]
    %v948 = vld [vmem:[%s5 + $0xf0] sm:$0xff]
    %v949 = vld [vmem:[%s5 + $0xf8] sm:$0xff]
    %v952 = vunpack.c.l.s4 1983009808
    %v953 = vunpack.c.0.s8 %v952
    %v954 = vlaneseq
    %v955 = vshrl.u32 %v954, 7
    %v956 = vsub.s32 %v953, %v955
    %v957 = vrot.slane %v917, %v956
    %v958 = vcombine.high %v957, %v957
    %961 = vmatprep.subr.mxu0 0.0
    %962 = vmatpush1.msra.mxu0 %v918
    %963 = vmatprep.subr.mxu0 0.0
    %964 = vmatpush1.msra.mxu0 %v919
    %965 = vmatprep.subr.mxu0 0.0
    %966 = vmatpush1.msra.mxu0 %v920
    %967 = vmatprep.subr.mxu0 0.0
    %968 = vmatpush1.msra.mxu0 %v921
    %969 = vmatprep.subr.mxu0 0.0
    %970 = vmatpush1.msra.mxu0 %v922
    %971 = vmatprep.subr.mxu0 0.0
    %972 = vmatpush1.msra.mxu0 %v923
    %973 = vmatprep.subr.mxu0 0.0
    %974 = vmatpush1.msra.mxu0 %v924
    %975 = vmatprep.subr.mxu0 0.0
    %976 = vmatpush1.msra.mxu0 %v925
    %977 = vmatprep.subr.mxu0 0.0
    %978 = vmatpush1.msra.mxu0 %v926
    %979 = vmatprep.subr.mxu0 0.0
    %980 = vmatpush1.msra.mxu0 %v927
    %981 = vmatprep.subr.mxu0 0.0
    %982 = vmatpush1.msra.mxu0 %v928
    %983 = vmatprep.subr.mxu0 0.0
    %984 = vmatpush1.msra.mxu0 %v929
    %985 = vmatprep.subr.mxu0 0.0
    %986 = vmatpush1.msra.mxu0 %v930
    %987 = vmatprep.subr.mxu0 0.0
    %988 = vmatpush1.msra.mxu0 %v931
    %989 = vmatprep.subr.mxu0 0.0
    %990 = vmatpush1.msra.mxu0 %v932
    %991 = vmatprep.subr.mxu0 0.0
    %992 = vmatpush1.msra.mxu0 %v933
    %993 = vmatprep.subr.mxu0 0.0
    %994 = vmatpush1.msra.mxu0 %v934
    %995 = vmatprep.subr.mxu0 0.0
    %996 = vmatpush1.msra.mxu0 %v935
    %997 = vmatprep.subr.mxu0 0.0
    %998 = vmatpush1.msra.mxu0 %v936
    %999 = vmatprep.subr.mxu0 0.0
    %1000 = vmatpush1.msra.mxu0 %v937
    %1001 = vmatprep.subr.mxu0 0.0
    %1002 = vmatpush1.msra.mxu0 %v938
    %1003 = vmatprep.subr.mxu0 0.0
    %1004 = vmatpush1.msra.mxu0 %v939
    %1005 = vmatprep.subr.mxu0 0.0
    %1006 = vmatpush1.msra.mxu0 %v940
    %1007 = vmatprep.subr.mxu0 0.0
    %1008 = vmatpush1.msra.mxu0 %v941
    %1009 = vmatprep.subr.mxu0 0.0
    %1010 = vmatpush1.msra.mxu0 %v942
    %1011 = vmatprep.subr.mxu0 0.0
    %1012 = vmatpush1.msra.mxu0 %v943
    %1013 = vmatprep.subr.mxu0 0.0
    %1014 = vmatpush1.msra.mxu0 %v944
    %1015 = vmatprep.subr.mxu0 0.0
    %1016 = vmatpush1.msra.mxu0 %v945
    %1017 = vmatprep.subr.mxu0 0.0
    %1018 = vmatpush1.msra.mxu0 %v946
    %1019 = vmatprep.subr.mxu0 0.0
    %1020 = vmatpush1.msra.mxu0 %v947
    %1021 = vmatprep.subr.mxu0 0.0
    %1022 = vmatpush1.msra.mxu0 %v948
    %1023 = vmatprep.subr.mxu0 0.0
    %1024 = vmatpush1.msra.mxu0 %v949
    %1025 = vmatprep.mubr.f32.mxu0 %v958
    %1026 = vmatmul.mubr.f32.gmra.mrb[0].mxu0 %v957
    %v1027 = vpop.f32.mrb[0].mxu0
    %v1028 = vadd.f32 0.0, %v1027
    %v1029 = vpop.f32.mrb[0].mxu0
    %1030 = vdwg.mxu0
    %v1031 = vld [vmem:[%s6] sm:$0xff]
    %v1032 = vld [vmem:[%s6 + $0x8] sm:$0xff]
    %v1033 = vld [vmem:[%s6 + $0x10] sm:$0xff]
    %v1034 = vld [vmem:[%s6 + $0x18] sm:$0xff]
    %v1035 = vld [vmem:[%s6 + $0x20] sm:$0xff]
    %v1036 = vld [vmem:[%s6 + $0x28] sm:$0xff]
    %v1037 = vld [vmem:[%s6 + $0x30] sm:$0xff]
    %v1038 = vld [vmem:[%s6 + $0x38] sm:$0xff]
    %vm1039 = vcmask 261120
    %v1041 = vsel %vm1039, %v1028, 0
    %1043 = vmatprep.subr.mxu0 %v1032
    %1044 = vmatpush1.msra.mxu0 %v1031
    %1045 = vmatprep.subr.mxu0 %v1034
    %1046 = vmatpush1.msra.mxu0 %v1033
    %1047 = vmatprep.subr.mxu0 %v1036
    %1048 = vmatpush1.msra.mxu0 %v1035
    %1049 = vmatprep.subr.mxu0 %v1038
    %1050 = vmatpush1.msra.mxu0 %v1037
    %1051 = vmatprep.subr.mxu0 0.0
    %1052 = vmatpush1.msra.mxu0 0.0
    %1053 = vmatprep.subr.mxu0 0.0
    %1054 = vmatpush1.msra.mxu0 0.0
    %1055 = vmatprep.subr.mxu0 0.0
    %1056 = vmatpush1.msra.mxu0 0.0
    %1057 = vmatprep.subr.mxu0 0.0
    %1058 = vmatpush1.msra.mxu0 0.0
    %1059 = vmatprep.subr.mxu0 0.0
    %1060 = vmatpush1.msra.mxu0 0.0
    %1061 = vmatprep.subr.mxu0 0.0
    %1062 = vmatpush1.msra.mxu0 0.0
    %1063 = vmatprep.subr.mxu0 0.0
    %1064 = vmatpush1.msra.mxu0 0.0
    %1065 = vmatprep.subr.mxu0 0.0
    %1066 = vmatpush1.msra.mxu0 0.0
    %1067 = vmatprep.subr.mxu0 0.0
    %1068 = vmatpush1.msra.mxu0 0.0
    %1069 = vmatprep.subr.mxu0 0.0
    %1070 = vmatpush1.msra.mxu0 0.0
    %1071 = vmatprep.subr.mxu0 0.0
    %1072 = vmatpush1.msra.mxu0 0.0
    %1073 = vmatprep.subr.mxu0 0.0
    %1074 = vmatpush1.msra.mxu0 0.0
    %1075 = vmatprep.subr.mxu0 0.0
    %1076 = vmatpush1.msra.mxu0 0.0
    %1077 = vmatprep.subr.mxu0 0.0
    %1078 = vmatpush1.msra.mxu0 0.0
    %1079 = vmatprep.subr.mxu0 0.0
    %1080 = vmatpush1.msra.mxu0 0.0
    %1081 = vmatprep.subr.mxu0 0.0
    %1082 = vmatpush1.msra.mxu0 0.0
    %1083 = vmatprep.subr.mxu0 0.0
    %1084 = vmatpush1.msra.mxu0 0.0
    %1085 = vmatprep.subr.mxu0 0.0
    %1086 = vmatpush1.msra.mxu0 0.0
    %1087 = vmatprep.subr.mxu0 0.0
    %1088 = vmatpush1.msra.mxu0 0.0
    %1089 = vmatprep.subr.mxu0 0.0
    %1090 = vmatpush1.msra.mxu0 0.0
    %1091 = vmatprep.subr.mxu0 0.0
    %1092 = vmatpush1.msra.mxu0 0.0
    %1093 = vmatprep.subr.mxu0 0.0
    %1094 = vmatpush1.msra.mxu0 0.0
    %1095 = vmatprep.subr.mxu0 0.0
    %1096 = vmatpush1.msra.mxu0 0.0
    %1097 = vmatprep.subr.mxu0 0.0
    %1098 = vmatpush1.msra.mxu0 0.0
    %1099 = vmatprep.subr.mxu0 0.0
    %1100 = vmatpush1.msra.mxu0 0.0
    %1101 = vmatprep.subr.mxu0 0.0
    %1102 = vmatpush1.msra.mxu0 0.0
    %1103 = vmatprep.subr.mxu0 0.0
    %1104 = vmatpush1.msra.mxu0 0.0
    %1105 = vmatprep.subr.mxu0 0.0
    %1106 = vmatpush1.msra.mxu0 0.0
    %1107 = vmatprep.mubr.f32.mxu0 0.0
    %1108 = vmatmul.mubr.f32.gmra.mrb[0].mxu0 %v1041
    %v1109 = vpop.f32.mrb[0].mxu0
    %v1110 = vadd.f32 0.0, %v1109
    %v1111 = vpop.f32.mrb[0].mxu0
    %v1112 = vadd.f32 0.0, %v1111
    %1113 = vdwg.mxu0
    %v1116 = vcombine.low %v1110, %v1112
    %v1118 = vunpack.c.l.s4 1983009808
    %v1119 = vunpack.c.0.s8 %v1118
    %v1120 = vlaneseq
    %v1121 = vshrl.u32 %v1120, 7
    %v1122 = vsub.s32 %v1119, %v1121
    %v1123 = vrot.slane %v1116, %v1122
    %1125 = vst [vmem:[#allocation6 + $0x8] sm:$0xf] %v1123
    %v1128 = vcombine.high %v350, %v350
    %v1130 = vunpack.c.l.s4 1983009808
    %v1131 = vunpack.c.0.s8 %v1130
    %v1132 = vlaneseq
    %v1133 = vshrl.u32 %v1132, 7
    %v1134 = vsub.s32 %v1131, %v1133
    %v1135 = vrot.slane %v350, %v1134
    %v1137 = vunpack.c.l.s4 1983009808
    %v1138 = vunpack.c.0.s8 %v1137
    %v1139 = vlaneseq
    %v1140 = vshrl.u32 %v1139, 7
    %v1141 = vsub.s32 %v1138, %v1140
    %v1142 = vrot.slane %v1128, %v1141
    %v1143 = vcombine.high %v1135, %v1135
    %v1144 = vcombine.high %v1142, %v1142
    %v1145 = vcombine.high %v351, %v351
    %v1147 = vunpack.c.l.s4 1983009808
    %v1148 = vunpack.c.0.s8 %v1147
    %v1149 = vlaneseq
    %v1150 = vshrl.u32 %v1149, 7
    %v1151 = vsub.s32 %v1148, %v1150
    %v1152 = vrot.slane %v351, %v1151
    %v1154 = vunpack.c.l.s4 1983009808
    %v1155 = vunpack.c.0.s8 %v1154
    %v1156 = vlaneseq
    %v1157 = vshrl.u32 %v1156, 7
    %v1158 = vsub.s32 %v1155, %v1157
    %v1159 = vrot.slane %v1145, %v1158
    %v1160 = vcombine.high %v1152, %v1152
    %v1161 = vcombine.high %v1159, %v1159
    %1170 = vrot.lane.b32.xlu0 %v1135, 112
    %v1171 = vpop.permute.xlu0 %1170
    %1172 = vrot.lane.b32.xlu0 %v1143, 112
    %v1173 = vpop.permute.xlu0 %1172
    %1174 = vrot.lane.b32.xlu0 %v1142, 112
    %v1175 = vpop.permute.xlu0 %1174
    %1176 = vrot.lane.b32.xlu0 %v1144, 112
    %v1177 = vpop.permute.xlu0 %1176
    %1178 = vrot.lane.b32.xlu0 %v1152, 112
    %v1179 = vpop.permute.xlu0 %1178
    %1180 = vrot.lane.b32.xlu0 %v1160, 112
    %v1181 = vpop.permute.xlu0 %1180
    %1182 = vrot.lane.b32.xlu0 %v1159, 112
    %v1183 = vpop.permute.xlu0 %1182
    %1184 = vrot.lane.b32.xlu0 %v1161, 112
    %v1185 = vpop.permute.xlu0 %1184
    %v1186 = vsel %vm435, %v1183, %v1185
    %v1187 = vsel %vm435, %v1181, %v1183
    %v1188 = vsel %vm435, %v1179, %v1181
    %v1189 = vsel %vm435, %v1177, %v1179
    %v1190 = vsel %vm435, %v1175, %v1177
    %v1191 = vsel %vm435, %v1173, %v1175
    %v1192 = vsel %vm435, %v1171, %v1173
    %v1193 = vsel %vm435, %v1185, %v1171
    %v1202 = vcombine.low %v1192, %v1191
    %v1203 = vcombine.low %v1190, %v1189
    %v1205 = vunpack.c.l.s4 1983009808
    %v1206 = vunpack.c.0.s8 %v1205
    %v1207 = vlaneseq
    %v1208 = vshrl.u32 %v1207, 7
    %v1209 = vsub.s32 %v1206, %v1208
    %v1210 = vrot.slane %v1202, %v1209
    %v1212 = vunpack.c.l.s4 1983009808
    %v1213 = vunpack.c.0.s8 %v1212
    %v1214 = vlaneseq
    %v1215 = vshrl.u32 %v1214, 7
    %v1216 = vsub.s32 %v1213, %v1215
    %v1217 = vrot.slane %v1203, %v1216
    %v1218 = vcombine.low %v1210, %v1217
    %v1219 = vcombine.low %v1188, %v1187
    %v1220 = vcombine.low %v1186, %v1193
    %v1222 = vunpack.c.l.s4 1983009808
    %v1223 = vunpack.c.0.s8 %v1222
    %v1224 = vlaneseq
    %v1225 = vshrl.u32 %v1224, 7
    %v1226 = vsub.s32 %v1223, %v1225
    %v1227 = vrot.slane %v1219, %v1226
    %v1229 = vunpack.c.l.s4 1983009808
    %v1230 = vunpack.c.0.s8 %v1229
    %v1231 = vlaneseq
    %v1232 = vshrl.u32 %v1231, 7
    %v1233 = vsub.s32 %v1230, %v1232
    %v1234 = vrot.slane %v1220, %v1233
    %v1235 = vcombine.low %v1227, %v1234
    %v1238 = vmax.f32 %v350, %v1218
    %v1239 = vmax.f32 %v351, %v1235
    %v1242 = vcombine.high %v1238, %v1238
    %v1244 = vunpack.c.l.s4 1983009808
    %v1245 = vunpack.c.0.s8 %v1244
    %v1246 = vlaneseq
    %v1247 = vshrl.u32 %v1246, 7
    %v1248 = vsub.s32 %v1245, %v1247
    %v1249 = vrot.slane %v1238, %v1248
    %v1251 = vunpack.c.l.s4 1983009808
    %v1252 = vunpack.c.0.s8 %v1251
    %v1253 = vlaneseq
    %v1254 = vshrl.u32 %v1253, 7
    %v1255 = vsub.s32 %v1252, %v1254
    %v1256 = vrot.slane %v1242, %v1255
    %v1257 = vcombine.high %v1249, %v1249
    %v1258 = vcombine.high %v1256, %v1256
    %v1259 = vcombine.high %v1239, %v1239
    %v1261 = vunpack.c.l.s4 1983009808
    %v1262 = vunpack.c.0.s8 %v1261
    %v1263 = vlaneseq
    %v1264 = vshrl.u32 %v1263, 7
    %v1265 = vsub.s32 %v1262, %v1264
    %v1266 = vrot.slane %v1239, %v1265
    %v1268 = vunpack.c.l.s4 1983009808
    %v1269 = vunpack.c.0.s8 %v1268
    %v1270 = vlaneseq
    %v1271 = vshrl.u32 %v1270, 7
    %v1272 = vsub.s32 %v1269, %v1271
    %v1273 = vrot.slane %v1259, %v1272
    %v1274 = vcombine.high %v1266, %v1266
    %v1275 = vcombine.high %v1273, %v1273
    %1284 = vrot.lane.b32.xlu0 %v1249, 96
    %v1285 = vpop.permute.xlu0 %1284
    %1286 = vrot.lane.b32.xlu0 %v1257, 96
    %v1287 = vpop.permute.xlu0 %1286
    %1288 = vrot.lane.b32.xlu0 %v1256, 96
    %v1289 = vpop.permute.xlu0 %1288
    %1290 = vrot.lane.b32.xlu0 %v1258, 96
    %v1291 = vpop.permute.xlu0 %1290
    %1292 = vrot.lane.b32.xlu0 %v1266, 96
    %v1293 = vpop.permute.xlu0 %1292
    %1294 = vrot.lane.b32.xlu0 %v1274, 96
    %v1295 = vpop.permute.xlu0 %1294
    %1296 = vrot.lane.b32.xlu0 %v1273, 96
    %v1297 = vpop.permute.xlu0 %1296
    %1298 = vrot.lane.b32.xlu0 %v1275, 96
    %v1299 = vpop.permute.xlu0 %1298
    %vm1300 = vcmp.lt.s32.totalorder %v110, 96
    %v1301 = vsel %vm1300, %v1297, %v1299
    %v1302 = vsel %vm1300, %v1295, %v1297
    %v1303 = vsel %vm1300, %v1293, %v1295
    %v1304 = vsel %vm1300, %v1291, %v1293
    %v1305 = vsel %vm1300, %v1289, %v1291
    %v1306 = vsel %vm1300, %v1287, %v1289
    %v1307 = vsel %vm1300, %v1285, %v1287
    %v1308 = vsel %vm1300, %v1299, %v1285
    %v1317 = vcombine.low %v1307, %v1306
    %v1318 = vcombine.low %v1305, %v1304
    %v1320 = vunpack.c.l.s4 1983009808
    %v1321 = vunpack.c.0.s8 %v1320
    %v1322 = vlaneseq
    %v1323 = vshrl.u32 %v1322, 7
    %v1324 = vsub.s32 %v1321, %v1323
    %v1325 = vrot.slane %v1317, %v1324
    %v1327 = vunpack.c.l.s4 1983009808
    %v1328 = vunpack.c.0.s8 %v1327
    %v1329 = vlaneseq
    %v1330 = vshrl.u32 %v1329, 7
    %v1331 = vsub.s32 %v1328, %v1330
    %v1332 = vrot.slane %v1318, %v1331
    %v1333 = vcombine.low %v1325, %v1332
    %v1334 = vcombine.low %v1303, %v1302
    %v1335 = vcombine.low %v1301, %v1308
    %v1337 = vunpack.c.l.s4 1983009808
    %v1338 = vunpack.c.0.s8 %v1337
    %v1339 = vlaneseq
    %v1340 = vshrl.u32 %v1339, 7
    %v1341 = vsub.s32 %v1338, %v1340
    %v1342 = vrot.slane %v1334, %v1341
    %v1344 = vunpack.c.l.s4 1983009808
    %v1345 = vunpack.c.0.s8 %v1344
    %v1346 = vlaneseq
    %v1347 = vshrl.u32 %v1346, 7
    %v1348 = vsub.s32 %v1345, %v1347
    %v1349 = vrot.slane %v1335, %v1348
    %v1350 = vcombine.low %v1342, %v1349
    %v1353 = vmax.f32 %v1238, %v1333
    %v1354 = vmax.f32 %v1239, %v1350
    %v1357 = vcombine.high %v1353, %v1353
    %v1359 = vunpack.c.l.s4 1983009808
    %v1360 = vunpack.c.0.s8 %v1359
    %v1361 = vlaneseq
    %v1362 = vshrl.u32 %v1361, 7
    %v1363 = vsub.s32 %v1360, %v1362
    %v1364 = vrot.slane %v1353, %v1363
    %v1366 = vunpack.c.l.s4 1983009808
    %v1367 = vunpack.c.0.s8 %v1366
    %v1368 = vlaneseq
    %v1369 = vshrl.u32 %v1368, 7
    %v1370 = vsub.s32 %v1367, %v1369
    %v1371 = vrot.slane %v1357, %v1370
    %v1372 = vcombine.high %v1364, %v1364
    %v1373 = vcombine.high %v1371, %v1371
    %v1374 = vcombine.high %v1354, %v1354
    %v1376 = vunpack.c.l.s4 1983009808
    %v1377 = vunpack.c.0.s8 %v1376
    %v1378 = vlaneseq
    %v1379 = vshrl.u32 %v1378, 7
    %v1380 = vsub.s32 %v1377, %v1379
    %v1381 = vrot.slane %v1354, %v1380
    %v1383 = vunpack.c.l.s4 1983009808
    %v1384 = vunpack.c.0.s8 %v1383
    %v1385 = vlaneseq
    %v1386 = vshrl.u32 %v1385, 7
    %v1387 = vsub.s32 %v1384, %v1386
    %v1388 = vrot.slane %v1374, %v1387
    %v1389 = vcombine.high %v1381, %v1381
    %v1390 = vcombine.high %v1388, %v1388
    %1399 = vrot.lane.b32.xlu0 %v1364, 96
    %v1400 = vpop.permute.xlu0 %1399
    %1401 = vrot.lane.b32.xlu0 %v1372, 96
    %v1402 = vpop.permute.xlu0 %1401
    %1403 = vrot.lane.b32.xlu0 %v1371, 96
    %v1404 = vpop.permute.xlu0 %1403
    %1405 = vrot.lane.b32.xlu0 %v1373, 96
    %v1406 = vpop.permute.xlu0 %1405
    %1407 = vrot.lane.b32.xlu0 %v1381, 96
    %v1408 = vpop.permute.xlu0 %1407
    %1409 = vrot.lane.b32.xlu0 %v1389, 96
    %v1410 = vpop.permute.xlu0 %1409
    %1411 = vrot.lane.b32.xlu0 %v1388, 96
    %v1412 = vpop.permute.xlu0 %1411
    %1413 = vrot.lane.b32.xlu0 %v1390, 96
    %v1414 = vpop.permute.xlu0 %1413
    %v1415 = vsel %vm1300, %v1412, %v1414
    %v1416 = vsel %vm1300, %v1410, %v1412
    %v1417 = vsel %vm1300, %v1408, %v1410
    %v1418 = vsel %vm1300, %v1406, %v1408
    %v1419 = vsel %vm1300, %v1404, %v1406
    %v1420 = vsel %vm1300, %v1402, %v1404
    %v1421 = vsel %vm1300, %v1400, %v1402
    %v1422 = vsel %vm1300, %v1414, %v1400
    %v1431 = vcombine.low %v1421, %v1420
    %v1432 = vcombine.low %v1419, %v1418
    %v1434 = vunpack.c.l.s4 1983009808
    %v1435 = vunpack.c.0.s8 %v1434
    %v1436 = vlaneseq
    %v1437 = vshrl.u32 %v1436, 7
    %v1438 = vsub.s32 %v1435, %v1437
    %v1439 = vrot.slane %v1431, %v1438
    %v1441 = vunpack.c.l.s4 1983009808
    %v1442 = vunpack.c.0.s8 %v1441
    %v1443 = vlaneseq
    %v1444 = vshrl.u32 %v1443, 7
    %v1445 = vsub.s32 %v1442, %v1444
    %v1446 = vrot.slane %v1432, %v1445
    %v1447 = vcombine.low %v1439, %v1446
    %v1448 = vcombine.low %v1417, %v1416
    %v1449 = vcombine.low %v1415, %v1422
    %v1451 = vunpack.c.l.s4 1983009808
    %v1452 = vunpack.c.0.s8 %v1451
    %v1453 = vlaneseq
    %v1454 = vshrl.u32 %v1453, 7
    %v1455 = vsub.s32 %v1452, %v1454
    %v1456 = vrot.slane %v1448, %v1455
    %v1458 = vunpack.c.l.s4 1983009808
    %v1459 = vunpack.c.0.s8 %v1458
    %v1460 = vlaneseq
    %v1461 = vshrl.u32 %v1460, 7
    %v1462 = vsub.s32 %v1459, %v1461
    %v1463 = vrot.slane %v1449, %v1462
    %v1464 = vcombine.low %v1456, %v1463
    %v1467 = vmax.f32 %v1353, %v1447
    %v1468 = vmax.f32 %v1354, %v1464
    %v1469 = vmul.f32 %v358, %v1467
    %v1471 = vrot.slane %v1467, 4
    %v1473 = vmul.f32 %v360, %v1471
    %v1474 = vmul.f32 %v364, %v1468
    %v1476 = vrot.slane %v1468, 4
    %v1478 = vmul.f32 %v366, %v1476
    %v1479 = vadd.f32 %v357, %v1469
    %v1480 = vadd.f32 %v1479, %v1473
    %v1481 = vadd.f32 %v1480, %v1474
    %v1482 = vadd.f32 %v1481, %v1478
    %v1483 = vld [vmem:[%s7] sm:$0xff]
    %v1484 = vld [vmem:[%s7 + $0x8] sm:$0xff]
    %v1485 = vld [vmem:[%s7 + $0x10] sm:$0xff]
    %v1486 = vld [vmem:[%s7 + $0x18] sm:$0xff]
    %v1487 = vld [vmem:[%s7 + $0x20] sm:$0xff]
    %v1488 = vld [vmem:[%s7 + $0x28] sm:$0xff]
    %v1489 = vld [vmem:[%s7 + $0x30] sm:$0xff]
    %v1490 = vld [vmem:[%s7 + $0x38] sm:$0xff]
    %v1491 = vld [vmem:[%s7 + $0x40] sm:$0xff]
    %v1492 = vld [vmem:[%s7 + $0x48] sm:$0xff]
    %v1493 = vld [vmem:[%s7 + $0x50] sm:$0xff]
    %v1494 = vld [vmem:[%s7 + $0x58] sm:$0xff]
    %v1495 = vld [vmem:[%s7 + $0x60] sm:$0xff]
    %v1496 = vld [vmem:[%s7 + $0x68] sm:$0xff]
    %v1497 = vld [vmem:[%s7 + $0x70] sm:$0xff]
    %v1498 = vld [vmem:[%s7 + $0x78] sm:$0xff]
    %v1499 = vld [vmem:[%s7 + $0x80] sm:$0xff]
    %v1500 = vld [vmem:[%s7 + $0x88] sm:$0xff]
    %v1501 = vld [vmem:[%s7 + $0x90] sm:$0xff]
    %v1502 = vld [vmem:[%s7 + $0x98] sm:$0xff]
    %v1503 = vld [vmem:[%s7 + $0xa0] sm:$0xff]
    %v1504 = vld [vmem:[%s7 + $0xa8] sm:$0xff]
    %v1505 = vld [vmem:[%s7 + $0xb0] sm:$0xff]
    %v1506 = vld [vmem:[%s7 + $0xb8] sm:$0xff]
    %v1507 = vld [vmem:[%s7 + $0xc0] sm:$0xff]
    %v1508 = vld [vmem:[%s7 + $0xc8] sm:$0xff]
    %v1509 = vld [vmem:[%s7 + $0xd0] sm:$0xff]
    %v1510 = vld [vmem:[%s7 + $0xd8] sm:$0xff]
    %v1511 = vld [vmem:[%s7 + $0xe0] sm:$0xff]
    %v1512 = vld [vmem:[%s7 + $0xe8] sm:$0xff]
    %v1513 = vld [vmem:[%s7 + $0xf0] sm:$0xff]
    %v1514 = vld [vmem:[%s7 + $0xf8] sm:$0xff]
    %v1517 = vunpack.c.l.s4 1983009808
    %v1518 = vunpack.c.0.s8 %v1517
    %v1519 = vlaneseq
    %v1520 = vshrl.u32 %v1519, 7
    %v1521 = vsub.s32 %v1518, %v1520
    %v1522 = vrot.slane %v1482, %v1521
    %v1523 = vcombine.high %v1522, %v1522
    %1526 = vmatprep.subr.mxu0 0.0
    %1527 = vmatpush1.msra.mxu0 %v1483
    %1528 = vmatprep.subr.mxu0 0.0
    %1529 = vmatpush1.msra.mxu0 %v1484
    %1530 = vmatprep.subr.mxu0 0.0
    %1531 = vmatpush1.msra.mxu0 %v1485
    %1532 = vmatprep.subr.mxu0 0.0
    %1533 = vmatpush1.msra.mxu0 %v1486
    %1534 = vmatprep.subr.mxu0 0.0
    %1535 = vmatpush1.msra.mxu0 %v1487
    %1536 = vmatprep.subr.mxu0 0.0
    %1537 = vmatpush1.msra.mxu0 %v1488
    %1538 = vmatprep.subr.mxu0 0.0
    %1539 = vmatpush1.msra.mxu0 %v1489
    %1540 = vmatprep.subr.mxu0 0.0
    %1541 = vmatpush1.msra.mxu0 %v1490
    %1542 = vmatprep.subr.mxu0 0.0
    %1543 = vmatpush1.msra.mxu0 %v1491
    %1544 = vmatprep.subr.mxu0 0.0
    %1545 = vmatpush1.msra.mxu0 %v1492
    %1546 = vmatprep.subr.mxu0 0.0
    %1547 = vmatpush1.msra.mxu0 %v1493
    %1548 = vmatprep.subr.mxu0 0.0
    %1549 = vmatpush1.msra.mxu0 %v1494
    %1550 = vmatprep.subr.mxu0 0.0
    %1551 = vmatpush1.msra.mxu0 %v1495
    %1552 = vmatprep.subr.mxu0 0.0
    %1553 = vmatpush1.msra.mxu0 %v1496
    %1554 = vmatprep.subr.mxu0 0.0
    %1555 = vmatpush1.msra.mxu0 %v1497
    %1556 = vmatprep.subr.mxu0 0.0
    %1557 = vmatpush1.msra.mxu0 %v1498
    %1558 = vmatprep.subr.mxu0 0.0
    %1559 = vmatpush1.msra.mxu0 %v1499
    %1560 = vmatprep.subr.mxu0 0.0
    %1561 = vmatpush1.msra.mxu0 %v1500
    %1562 = vmatprep.subr.mxu0 0.0
    %1563 = vmatpush1.msra.mxu0 %v1501
    %1564 = vmatprep.subr.mxu0 0.0
    %1565 = vmatpush1.msra.mxu0 %v1502
    %1566 = vmatprep.subr.mxu0 0.0
    %1567 = vmatpush1.msra.mxu0 %v1503
    %1568 = vmatprep.subr.mxu0 0.0
    %1569 = vmatpush1.msra.mxu0 %v1504
    %1570 = vmatprep.subr.mxu0 0.0
    %1571 = vmatpush1.msra.mxu0 %v1505
    %1572 = vmatprep.subr.mxu0 0.0
    %1573 = vmatpush1.msra.mxu0 %v1506
    %1574 = vmatprep.subr.mxu0 0.0
    %1575 = vmatpush1.msra.mxu0 %v1507
    %1576 = vmatprep.subr.mxu0 0.0
    %1577 = vmatpush1.msra.mxu0 %v1508
    %1578 = vmatprep.subr.mxu0 0.0
    %1579 = vmatpush1.msra.mxu0 %v1509
    %1580 = vmatprep.subr.mxu0 0.0
    %1581 = vmatpush1.msra.mxu0 %v1510
    %1582 = vmatprep.subr.mxu0 0.0
    %1583 = vmatpush1.msra.mxu0 %v1511
    %1584 = vmatprep.subr.mxu0 0.0
    %1585 = vmatpush1.msra.mxu0 %v1512
    %1586 = vmatprep.subr.mxu0 0.0
    %1587 = vmatpush1.msra.mxu0 %v1513
    %1588 = vmatprep.subr.mxu0 0.0
    %1589 = vmatpush1.msra.mxu0 %v1514
    %1590 = vmatprep.mubr.f32.mxu0 %v1523
    %1591 = vmatmul.mubr.f32.gmra.mrb[0].mxu0 %v1522
    %v1592 = vpop.f32.mrb[0].mxu0
    %v1593 = vadd.f32 0.0, %v1592
    %v1594 = vpop.f32.mrb[0].mxu0
    %1595 = vdwg.mxu0
    %v1596 = vld [vmem:[%s8] sm:$0xff]
    %v1597 = vld [vmem:[%s8 + $0x8] sm:$0xff]
    %vm1598 = vcmask 64512
    %v1600 = vsel %vm1598, %v1593, 0
    %1602 = vmatprep.subr.mxu0 %v1597
    %1603 = vmatpush1.msra.mxu0 %v1596
    %1604 = vmatprep.subr.mxu0 0.0
    %1605 = vmatpush1.msra.mxu0 0.0
    %1606 = vmatprep.subr.mxu0 0.0
    %1607 = vmatpush1.msra.mxu0 0.0
    %1608 = vmatprep.subr.mxu0 0.0
    %1609 = vmatpush1.msra.mxu0 0.0
    %1610 = vmatprep.subr.mxu0 0.0
    %1611 = vmatpush1.msra.mxu0 0.0
    %1612 = vmatprep.subr.mxu0 0.0
    %1613 = vmatpush1.msra.mxu0 0.0
    %1614 = vmatprep.subr.mxu0 0.0
    %1615 = vmatpush1.msra.mxu0 0.0
    %1616 = vmatprep.subr.mxu0 0.0
    %1617 = vmatpush1.msra.mxu0 0.0
    %1618 = vmatprep.subr.mxu0 0.0
    %1619 = vmatpush1.msra.mxu0 0.0
    %1620 = vmatprep.subr.mxu0 0.0
    %1621 = vmatpush1.msra.mxu0 0.0
    %1622 = vmatprep.subr.mxu0 0.0
    %1623 = vmatpush1.msra.mxu0 0.0
    %1624 = vmatprep.subr.mxu0 0.0
    %1625 = vmatpush1.msra.mxu0 0.0
    %1626 = vmatprep.subr.mxu0 0.0
    %1627 = vmatpush1.msra.mxu0 0.0
    %1628 = vmatprep.subr.mxu0 0.0
    %1629 = vmatpush1.msra.mxu0 0.0
    %1630 = vmatprep.subr.mxu0 0.0
    %1631 = vmatpush1.msra.mxu0 0.0
    %1632 = vmatprep.subr.mxu0 0.0
    %1633 = vmatpush1.msra.mxu0 0.0
    %1634 = vmatprep.subr.mxu0 0.0
    %1635 = vmatpush1.msra.mxu0 0.0
    %1636 = vmatprep.subr.mxu0 0.0
    %1637 = vmatpush1.msra.mxu0 0.0
    %1638 = vmatprep.subr.mxu0 0.0
    %1639 = vmatpush1.msra.mxu0 0.0
    %1640 = vmatprep.subr.mxu0 0.0
    %1641 = vmatpush1.msra.mxu0 0.0
    %1642 = vmatprep.subr.mxu0 0.0
    %1643 = vmatpush1.msra.mxu0 0.0
    %1644 = vmatprep.subr.mxu0 0.0
    %1645 = vmatpush1.msra.mxu0 0.0
    %1646 = vmatprep.subr.mxu0 0.0
    %1647 = vmatpush1.msra.mxu0 0.0
    %1648 = vmatprep.subr.mxu0 0.0
    %1649 = vmatpush1.msra.mxu0 0.0
    %1650 = vmatprep.subr.mxu0 0.0
    %1651 = vmatpush1.msra.mxu0 0.0
    %1652 = vmatprep.subr.mxu0 0.0
    %1653 = vmatpush1.msra.mxu0 0.0
    %1654 = vmatprep.subr.mxu0 0.0
    %1655 = vmatpush1.msra.mxu0 0.0
    %1656 = vmatprep.subr.mxu0 0.0
    %1657 = vmatpush1.msra.mxu0 0.0
    %1658 = vmatprep.subr.mxu0 0.0
    %1659 = vmatpush1.msra.mxu0 0.0
    %1660 = vmatprep.subr.mxu0 0.0
    %1661 = vmatpush1.msra.mxu0 0.0
    %1662 = vmatprep.subr.mxu0 0.0
    %1663 = vmatpush1.msra.mxu0 0.0
    %1664 = vmatprep.subr.mxu0 0.0
    %1665 = vmatpush1.msra.mxu0 0.0
    %1666 = vmatprep.mubr.f32.mxu0 0.0
    %1667 = vmatmul.mubr.f32.gmra.mrb[0].mxu0 %v1600
    %v1668 = vpop.f32.mrb[0].mxu0
    %v1669 = vadd.f32 0.0, %v1668
    %v1670 = vpop.f32.mrb[0].mxu0
    %v1671 = vadd.f32 0.0, %v1670
    %1672 = vdwg.mxu0
    %v1675 = vcombine.low %v1669, %v1671
    %v1677 = vunpack.c.l.s4 1983009808
    %v1678 = vunpack.c.0.s8 %v1677
    %v1679 = vlaneseq
    %v1680 = vshrl.u32 %v1679, 7
    %v1681 = vsub.s32 %v1678, %v1680
    %v1682 = vrot.slane %v1675, %v1681
    %1684 = vst [vmem:[#allocation6 + $0xc] sm:$0xf] %v1682
    // Predicated region
    $region42: #{tpu_custom_call.1} parent=1 // pred_check
      _
    $region43: #{tpu_custom_call.1} parent=1 // pred_check_branch
      %1686 = sbr.rel (0) target = $region45
    $region44: #{tpu_custom_call.1} parent=1 // pred_region
      %s1688 = ssub.s32 256, 256
      %1689 = vsyncadd [#allocation4], %s1688
      %s1691 = sshll.u32 [#allocation6], 4
      %s1692 = int_to_ptr.vmem [resolvable:$true] %s1691
      %1694 = dma.vmem_to_hbm [thread:$0]  %s1692, 256, %s9, [#allocation4]
    $region45: #{tpu_custom_call.1} parent=1 // pred_fallthru
      _
    // Predicated region
    $region46: #{tpu_custom_call.1} parent=1 // pred_check
      _
    $region47: #{tpu_custom_call.1} parent=1 // pred_check_branch
      %1696 = sbr.rel (0) target = $region49
    $region48: #{tpu_custom_call.1} parent=1 // pred_region
      %1697 = dma.done [#allocation4], 256
    $region49: #{tpu_custom_call.1} parent=1 // pred_fallthru
      _
    %1698 = vsyncpa [#allocation4], 1
    %1699 = vsyncpa [#allocation5], 1

</llo_original>
